<compile_context>
chip_gen: v6e
topology: v6e:2x2x1
jax: 0.10.0
libtpu: 0.0.40
codegen_flags: <defaults>
</compile_context>

<pallas_src>
import functools
import math

import jax
import jax.numpy as jnp
import numpy as np
from jax.experimental import pallas as pl
from jax.experimental.pallas import tpu as pltpu


def skip_lstm_kernel(ax_ref, v_ref, skip_w_ref, skip_b_ref,
                     out_ref, hf_ref, cf_ref, uf_ref,
                     h_scr, c_scr, u_scr, *, hidden_size, t_chunk):
    H = hidden_size
    chunk = pl.program_id(0)

    # Initialize recurrent state once (grid axis is sequential / "arbitrary").
    @pl.when(chunk == 0)
    def _():
        h_scr[...] = jnp.zeros_like(h_scr)
        c_scr[...] = jnp.zeros_like(c_scr)
        u_scr[...] = jnp.ones_like(u_scr)   # u_t starts at 1.0

    # Hoist loop-invariant loads above the time loop.
    V = v_ref[...]             # (H, 4H)
    w_row = skip_w_ref[...]    # (1, H)
    b_skip = skip_b_ref[...]   # (1, 1)
    ax = ax_ref[...]           # (B, T_CHUNK, 4H)  == x_t @ U + bias, precomputed

    # State carried in registers across the unrolled chunk.
    h = h_scr[...]             # (B, H)
    c = c_scr[...]             # (B, H)
    u_t = u_scr[...]           # (B, 1)

    hs = []
    for t in range(t_chunk):   # static unrolled loop: static slices everywhere
        a = ax[:, t, :] + jnp.dot(h, V, preferred_element_type=jnp.float32)
        i_g = jax.nn.sigmoid(a[:, :H])
        f_g = jax.nn.sigmoid(a[:, H:2 * H])
        g_g = jnp.tanh(a[:, 2 * H:3 * H])
        o_g = jax.nn.sigmoid(a[:, 3 * H:])

        c = f_g * c + i_g * g_g
        u = jnp.round(u_t)                                  # BinaryFunction fwd
        h = u * (o_g * jnp.tanh(c)) + (1.0 - u) * h
        # skip gate: VPU multiply + lane reduction instead of an N=1 MXU matmul
        cum = jax.nn.sigmoid(
            jnp.sum(h * w_row, axis=-1, keepdims=True) + b_skip)   # (B, 1)
        u_t = u * cum + (1.0 - u) * (u_t + jnp.minimum(cum, 1.0 - u_t))
        hs.append(h)

    # One dense chunk store in the final (B, S, H) layout.
    out_ref[...] = jnp.stack(hs, axis=1)    # (B, T_CHUNK, H)

    # Persist state for the next chunk (single VMEM write per chunk).
    h_scr[...] = h
    c_scr[...] = c
    u_scr[...] = u_t

    @pl.when(chunk == pl.num_programs(0) - 1)
    def _():
        hf_ref[...] = h
        cf_ref[...] = c
        uf_ref[...] = u_t


def _pick_chunk(seq_len):
    for cand in (32, 16, 8):
        if seq_len % cand == 0:
            return cand
    return seq_len  # block dim equal to the full array dim is always legal


def skip_lstm_forward(x, U, V, bias, skip_w, skip_b):
    """x: (batch, seq, input_size) f32 -> (output (B,S,H), (h, c, u_t))."""
    B, S, I = x.shape
    H = V.shape[0]

    # Hoisted input projection: one large matmul at full MXU utilization.
    a_x = jnp.einsum('bsi,io->bso', x, U) + bias.reshape(1, 1, 4 * H)  # (B,S,4H)

    skip_w_row = skip_w.reshape(1, H)     # (H,1) column -> (1,H) row
    skip_b2 = skip_b.reshape(1, 1)

    t_chunk = _pick_chunk(S)
    n_chunks = S // t_chunk

    kernel = functools.partial(skip_lstm_kernel, hidden_size=H, t_chunk=t_chunk)

    grid_spec = pltpu.PrefetchScalarGridSpec(
        num_scalar_prefetch=0,
        grid=(n_chunks,),
        in_specs=[
            pl.BlockSpec((B, t_chunk, 4 * H), lambda tc: (0, tc, 0)),  # A_x chunk
            pl.BlockSpec((H, 4 * H), lambda tc: (0, 0)),               # V
            pl.BlockSpec((1, H), lambda tc: (0, 0)),                   # skip_w row
            pl.BlockSpec((1, 1), lambda tc: (0, 0)),                   # skip_b
        ],
        out_specs=[
            pl.BlockSpec((B, t_chunk, H), lambda tc: (0, tc, 0)),      # output chunk
            pl.BlockSpec((B, H), lambda tc: (0, 0)),                   # final h
            pl.BlockSpec((B, H), lambda tc: (0, 0)),                   # final c
            pl.BlockSpec((B, 1), lambda tc: (0, 0)),                   # final u_t
        ],
        scratch_shapes=[
            pltpu.VMEM((B, H), jnp.float32),   # h state
            pltpu.VMEM((B, H), jnp.float32),   # c state
            pltpu.VMEM((B, 1), jnp.float32),   # u_t state
        ],
    )

    output, h_final, c_final, u_final = pl.pallas_call(
        kernel,
        out_shape=(
            jax.ShapeDtypeStruct((B, S, H), jnp.float32),
            jax.ShapeDtypeStruct((B, H), jnp.float32),
            jax.ShapeDtypeStruct((B, H), jnp.float32),
            jax.ShapeDtypeStruct((B, 1), jnp.float32),
        ),
        grid_spec=grid_spec,
        compiler_params=pltpu.CompilerParams(
            dimension_semantics=("arbitrary",)),   # sequential recurrence in time
    )(a_x, V, skip_w_row, skip_b2)

    return output, (h_final, c_final, u_final)


def ref_forward(x, U, V, bias, skip_w, skip_b):
    """Pure-JAX reference mirroring the PyTorch training-branch forward."""
    B, S, _ = x.shape
    H = V.shape[0]
    h = jnp.zeros((B, H), jnp.float32)
    c = jnp.zeros((B, H), jnp.float32)
    u_t = jnp.ones((B, 1), jnp.float32)
    outs = []
    for t in range(S):
        x_t = x[:, t, :]
        A = x_t @ U + h @ V + bias
        i = jax.nn.sigmoid(A[:, :H])
        f = jax.nn.sigmoid(A[:, H:2 * H])
        g = jnp.tanh(A[:, 2 * H:3 * H])
        o = jax.nn.sigmoid(A[:, 3 * H:])
        c = f * c + i * g
        u = jnp.round(u_t)
        h = u * (o * jnp.tanh(c)) + (1.0 - u) * h
        cum_u = jax.nn.sigmoid(h @ skip_w + skip_b)
        u_t = u * cum_u + (1.0 - u) * (u_t + jnp.minimum(cum_u, 1.0 - u_t))
        outs.append(h)
    return jnp.stack(outs, axis=1), (h, c, u_t)


if __name__ == "__main__":
    batch, seq_len, input_size, hidden_size = 2, 8, 16, 32

    key = jax.random.PRNGKey(0)
    k_x, k_u, k_v, k_b, k_sw = jax.random.split(key, 5)

    # Deterministic parameter init mirroring the module's init_weights():
    #   uniform(-stdv, stdv) for U, V, bias; xavier_uniform for skip_w; ones for skip_b.
    stdv = 1.0 / math.sqrt(hidden_size)
    U = jax.random.uniform(k_u, (input_size, hidden_size * 4),
                           minval=-stdv, maxval=stdv, dtype=jnp.float32)
    V = jax.random.uniform(k_v, (hidden_size, hidden_size * 4),
                           minval=-stdv, maxval=stdv, dtype=jnp.float32)
    bias = jax.random.uniform(k_b, (hidden_size * 4,),
                              minval=-stdv, maxval=stdv, dtype=jnp.float32)
    xavier_bound = math.sqrt(6.0 / (hidden_size + 1))
    skip_w = jax.random.uniform(k_sw, (hidden_size, 1),
                                minval=-xavier_bound, maxval=xavier_bound,
                                dtype=jnp.float32)
    skip_b = jnp.ones((1,), jnp.float32)

    x = jax.random.normal(k_x, (batch, seq_len, input_size), dtype=jnp.float32)

    out, (h_f, c_f, u_f) = skip_lstm_forward(x, U, V, bias, skip_w, skip_b)
    jax.block_until_ready((out, h_f, c_f, u_f))

    out_ref, (h_r, c_r, u_r) = ref_forward(x, U, V, bias, skip_w, skip_b)
    np.testing.assert_allclose(np.asarray(out), np.asarray(out_ref),
                               rtol=1e-4, atol=1e-4)
    np.testing.assert_allclose(np.asarray(h_f), np.asarray(h_r),
                               rtol=1e-4, atol=1e-4)
    np.testing.assert_allclose(np.asarray(c_f), np.asarray(c_r),
                               rtol=1e-4, atol=1e-4)
    np.testing.assert_allclose(np.asarray(u_f), np.asarray(u_r),
                               rtol=1e-4, atol=1e-4)

    print("KERNEL_OK")
</pallas_src>

<mosaic_0001>
module attributes {stable_mosaic.version = 11 : i64} {
  func.func @skip_lstm_kernel(%arg0: i32, %arg1: memref<2x8x128xf32, #tpu.memory_space<vmem>>, %arg2: memref<32x128xf32, #tpu.memory_space<vmem>>, %arg3: memref<1x32xf32, #tpu.memory_space<vmem>>, %arg4: memref<1x1xf32, #tpu.memory_space<vmem>>, %arg5: memref<2x8x32xf32, #tpu.memory_space<vmem>>, %arg6: memref<2x32xf32, #tpu.memory_space<vmem>>, %arg7: memref<2x32xf32, #tpu.memory_space<vmem>>, %arg8: memref<2x1xf32, #tpu.memory_space<vmem>>, %arg9: memref<2x32xf32, #tpu.memory_space<vmem>>, %arg10: memref<2x32xf32, #tpu.memory_space<vmem>>, %arg11: memref<2x1xf32, #tpu.memory_space<vmem>>) attributes {dimension_semantics = [#tpu.dimension_semantics<arbitrary>], iteration_bounds = array<i64: 1>, scalar_prefetch = 0 : i64, scratch_operands = 3 : i64, tpu.core_type = #tpu.core_type<tc>, window_params = [{transform_indices = @transform_0, window_bounds = array<i64: 2, 8, 128>}, {pipeline_mode = #tpu.pipeline_mode<synchronous>, transform_indices = @transform_1, window_bounds = array<i64: 32, 128>}, {pipeline_mode = #tpu.pipeline_mode<synchronous>, transform_indices = @transform_2, window_bounds = array<i64: 1, 32>}, {pipeline_mode = #tpu.pipeline_mode<synchronous>, transform_indices = @transform_3, window_bounds = array<i64: 1, 1>}, {transform_indices = @transform_4, window_bounds = array<i64: 2, 8, 32>}, {pipeline_mode = #tpu.pipeline_mode<synchronous>, transform_indices = @transform_5, window_bounds = array<i64: 2, 32>}, {pipeline_mode = #tpu.pipeline_mode<synchronous>, transform_indices = @transform_6, window_bounds = array<i64: 2, 32>}, {pipeline_mode = #tpu.pipeline_mode<synchronous>, transform_indices = @transform_7, window_bounds = array<i64: 2, 1>}]} {
    %c0_i32 = arith.constant 0 : i32
    %0 = arith.cmpi eq, %arg0, %c0_i32 : i32
    %1 = arith.extui %0 : i1 to i32
    %c0_i32_0 = arith.constant 0 : i32
    %2 = arith.cmpi ne, %1, %c0_i32_0 : i32
    scf.if %2 {
      %cst_97 = arith.constant 0.000000e+00 : f32
      %482 = vector.broadcast %cst_97 : f32 to vector<2x32xf32>
      %c0_98 = arith.constant 0 : index
      %c0_99 = arith.constant 0 : index
      %483 = vector.load %arg9[%c0_98, %c0_99] : memref<2x32xf32, #tpu.memory_space<vmem>>, vector<2x32xf32>
      tpu.vector_store %arg9[%c0_98, %c0_99], %482 {strides = array<i32>} : memref<2x32xf32, #tpu.memory_space<vmem>>, vector<2x32xf32>,
      %cst_100 = arith.constant 0.000000e+00 : f32
      %484 = vector.broadcast %cst_100 : f32 to vector<2x32xf32>
      %c0_101 = arith.constant 0 : index
      %c0_102 = arith.constant 0 : index
      %485 = vector.load %arg10[%c0_101, %c0_102] : memref<2x32xf32, #tpu.memory_space<vmem>>, vector<2x32xf32>
      tpu.vector_store %arg10[%c0_101, %c0_102], %484 {strides = array<i32>} : memref<2x32xf32, #tpu.memory_space<vmem>>, vector<2x32xf32>,
      %cst_103 = arith.constant 1.000000e+00 : f32
      %486 = vector.broadcast %cst_103 : f32 to vector<2x1xf32>
      %c0_104 = arith.constant 0 : index
      %c0_105 = arith.constant 0 : index
      %487 = vector.load %arg11[%c0_104, %c0_105] : memref<2x1xf32, #tpu.memory_space<vmem>>, vector<2x1xf32>
      tpu.vector_store %arg11[%c0_104, %c0_105], %486 {strides = array<i32>} : memref<2x1xf32, #tpu.memory_space<vmem>>, vector<2x1xf32>,
    } else {
    }
    %c0 = arith.constant 0 : index
    %c0_1 = arith.constant 0 : index
    %3 = vector.load %arg2[%c0, %c0_1] : memref<32x128xf32, #tpu.memory_space<vmem>>, vector<32x128xf32>
    %c0_2 = arith.constant 0 : index
    %c0_3 = arith.constant 0 : index
    %4 = vector.load %arg3[%c0_2, %c0_3] : memref<1x32xf32, #tpu.memory_space<vmem>>, vector<1x32xf32>
    %c0_4 = arith.constant 0 : index
    %c0_5 = arith.constant 0 : index
    %5 = vector.load %arg4[%c0_4, %c0_5] : memref<1x1xf32, #tpu.memory_space<vmem>>, vector<1x1xf32>
    %c0_6 = arith.constant 0 : index
    %c0_7 = arith.constant 0 : index
    %c0_8 = arith.constant 0 : index
    %6 = vector.load %arg1[%c0_6, %c0_7, %c0_8] : memref<2x8x128xf32, #tpu.memory_space<vmem>>, vector<2x8x128xf32>
    %c0_9 = arith.constant 0 : index
    %c0_10 = arith.constant 0 : index
    %7 = vector.load %arg9[%c0_9, %c0_10] : memref<2x32xf32, #tpu.memory_space<vmem>>, vector<2x32xf32>
    %c0_11 = arith.constant 0 : index
    %c0_12 = arith.constant 0 : index
    %8 = vector.load %arg10[%c0_11, %c0_12] : memref<2x32xf32, #tpu.memory_space<vmem>>, vector<2x32xf32>
    %c0_13 = arith.constant 0 : index
    %c0_14 = arith.constant 0 : index
    %9 = vector.load %arg11[%c0_13, %c0_14] : memref<2x1xf32, #tpu.memory_space<vmem>>, vector<2x1xf32>
    %10 = vector.extract_strided_slice %6 {offsets = [0, 0, 0], sizes = [2, 1, 128], strides = [1, 1, 1]} : vector<2x8x128xf32> to vector<2x1x128xf32>
    %11 = vector.shape_cast %10 : vector<2x1x128xf32> to vector<2x128xf32>
    %cst = arith.constant dense<0.000000e+00> : vector<2x128xf32>
    %12 = tpu.matmul %7, %3, %cst {dimension_numbers = #tpu.dot_dimension_numbers<[1], [0], [0], [1], [0, 0, 1, 1], [], []>} : vector<2x32xf32>, vector<32x128xf32>, vector<2x128xf32> -> vector<2x128xf32>
    %13 = arith.addf %11, %12 : vector<2x128xf32>
    %14 = vector.extract_strided_slice %13 {offsets = [0, 0], sizes = [2, 32], strides = [1, 1]} : vector<2x128xf32> to vector<2x32xf32>
    %15 = arith.negf %14 : vector<2x32xf32>
    %16 = math.exp %15 : vector<2x32xf32>
    %cst_15 = arith.constant 1.000000e+00 : f32
    %17 = vector.broadcast %cst_15 : f32 to vector<2x32xf32>
    %18 = arith.addf %17, %16 : vector<2x32xf32>
    %19 = arith.divf %17, %18 : vector<2x32xf32>
    %20 = vector.extract_strided_slice %13 {offsets = [0, 32], sizes = [2, 32], strides = [1, 1]} : vector<2x128xf32> to vector<2x32xf32>
    %21 = arith.negf %20 : vector<2x32xf32>
    %22 = math.exp %21 : vector<2x32xf32>
    %cst_16 = arith.constant 1.000000e+00 : f32
    %23 = vector.broadcast %cst_16 : f32 to vector<2x32xf32>
    %24 = arith.addf %23, %22 : vector<2x32xf32>
    %25 = arith.divf %23, %24 : vector<2x32xf32>
    %26 = vector.extract_strided_slice %13 {offsets = [0, 64], sizes = [2, 32], strides = [1, 1]} : vector<2x128xf32> to vector<2x32xf32>
    %27 = math.tanh %26 : vector<2x32xf32>
    %28 = vector.extract_strided_slice %13 {offsets = [0, 96], sizes = [2, 32], strides = [1, 1]} : vector<2x128xf32> to vector<2x32xf32>
    %29 = arith.negf %28 : vector<2x32xf32>
    %30 = math.exp %29 : vector<2x32xf32>
    %cst_17 = arith.constant 1.000000e+00 : f32
    %31 = vector.broadcast %cst_17 : f32 to vector<2x32xf32>
    %32 = arith.addf %31, %30 : vector<2x32xf32>
    %33 = arith.divf %31, %32 : vector<2x32xf32>
    %34 = arith.mulf %25, %8 : vector<2x32xf32>
    %35 = arith.mulf %19, %27 : vector<2x32xf32>
    %36 = arith.addf %34, %35 : vector<2x32xf32>
    %37 = math.roundeven %9 : vector<2x1xf32>
    %38 = math.tanh %36 : vector<2x32xf32>
    %39 = arith.mulf %33, %38 : vector<2x32xf32>
    %40 = vector.broadcast %37 : vector<2x1xf32> to vector<2x32xf32>
    %41 = arith.mulf %40, %39 : vector<2x32xf32>
    %cst_18 = arith.constant 1.000000e+00 : f32
    %42 = vector.broadcast %cst_18 : f32 to vector<2x1xf32>
    %43 = arith.subf %42, %37 : vector<2x1xf32>
    %44 = vector.broadcast %43 : vector<2x1xf32> to vector<2x32xf32>
    %45 = arith.mulf %44, %7 : vector<2x32xf32>
    %46 = arith.addf %41, %45 : vector<2x32xf32>
    %47 = vector.broadcast %4 : vector<1x32xf32> to vector<2x32xf32>
    %48 = arith.mulf %46, %47 : vector<2x32xf32>
    %cst_19 = arith.constant dense<0.000000e+00> : vector<2xf32>
    %49 = vector.multi_reduction <add>, %48, %cst_19 [1] : vector<2x32xf32> to vector<2xf32>
    %50 = vector.shape_cast %49 : vector<2xf32> to vector<2x1xf32>
    %51 = vector.broadcast %5 : vector<1x1xf32> to vector<2x1xf32>
    %52 = arith.addf %50, %51 : vector<2x1xf32>
    %53 = arith.negf %52 : vector<2x1xf32>
    %54 = math.exp %53 : vector<2x1xf32>
    %cst_20 = arith.constant 1.000000e+00 : f32
    %55 = vector.broadcast %cst_20 : f32 to vector<2x1xf32>
    %56 = arith.addf %55, %54 : vector<2x1xf32>
    %57 = arith.divf %55, %56 : vector<2x1xf32>
    %58 = arith.mulf %37, %57 : vector<2x1xf32>
    %cst_21 = arith.constant 1.000000e+00 : f32
    %59 = vector.broadcast %cst_21 : f32 to vector<2x1xf32>
    %60 = arith.subf %59, %37 : vector<2x1xf32>
    %cst_22 = arith.constant 1.000000e+00 : f32
    %61 = vector.broadcast %cst_22 : f32 to vector<2x1xf32>
    %62 = arith.subf %61, %9 : vector<2x1xf32>
    %63 = arith.minimumf %57, %62 : vector<2x1xf32>
    %64 = arith.addf %9, %63 : vector<2x1xf32>
    %65 = arith.mulf %60, %64 : vector<2x1xf32>
    %66 = arith.addf %58, %65 : vector<2x1xf32>
    %67 = vector.extract_strided_slice %6 {offsets = [0, 1, 0], sizes = [2, 1, 128], strides = [1, 1, 1]} : vector<2x8x128xf32> to vector<2x1x128xf32>
    %68 = vector.shape_cast %67 : vector<2x1x128xf32> to vector<2x128xf32>
    %cst_23 = arith.constant dense<0.000000e+00> : vector<2x128xf32>
    %69 = tpu.matmul %46, %3, %cst_23 {dimension_numbers = #tpu.dot_dimension_numbers<[1], [0], [0], [1], [0, 0, 1, 1], [], []>} : vector<2x32xf32>, vector<32x128xf32>, vector<2x128xf32> -> vector<2x128xf32>
    %70 = arith.addf %68, %69 : vector<2x128xf32>
    %71 = vector.extract_strided_slice %70 {offsets = [0, 0], sizes = [2, 32], strides = [1, 1]} : vector<2x128xf32> to vector<2x32xf32>
    %72 = arith.negf %71 : vector<2x32xf32>
    %73 = math.exp %72 : vector<2x32xf32>
    %cst_24 = arith.constant 1.000000e+00 : f32
    %74 = vector.broadcast %cst_24 : f32 to vector<2x32xf32>
    %75 = arith.addf %74, %73 : vector<2x32xf32>
    %76 = arith.divf %74, %75 : vector<2x32xf32>
    %77 = vector.extract_strided_slice %70 {offsets = [0, 32], sizes = [2, 32], strides = [1, 1]} : vector<2x128xf32> to vector<2x32xf32>
    %78 = arith.negf %77 : vector<2x32xf32>
    %79 = math.exp %78 : vector<2x32xf32>
    %cst_25 = arith.constant 1.000000e+00 : f32
    %80 = vector.broadcast %cst_25 : f32 to vector<2x32xf32>
    %81 = arith.addf %80, %79 : vector<2x32xf32>
    %82 = arith.divf %80, %81 : vector<2x32xf32>
    %83 = vector.extract_strided_slice %70 {offsets = [0, 64], sizes = [2, 32], strides = [1, 1]} : vector<2x128xf32> to vector<2x32xf32>
    %84 = math.tanh %83 : vector<2x32xf32>
    %85 = vector.extract_strided_slice %70 {offsets = [0, 96], sizes = [2, 32], strides = [1, 1]} : vector<2x128xf32> to vector<2x32xf32>
    %86 = arith.negf %85 : vector<2x32xf32>
    %87 = math.exp %86 : vector<2x32xf32>
    %cst_26 = arith.constant 1.000000e+00 : f32
    %88 = vector.broadcast %cst_26 : f32 to vector<2x32xf32>
    %89 = arith.addf %88, %87 : vector<2x32xf32>
    %90 = arith.divf %88, %89 : vector<2x32xf32>
    %91 = arith.mulf %82, %36 : vector<2x32xf32>
    %92 = arith.mulf %76, %84 : vector<2x32xf32>
    %93 = arith.addf %91, %92 : vector<2x32xf32>
    %94 = math.roundeven %66 : vector<2x1xf32>
    %95 = math.tanh %93 : vector<2x32xf32>
    %96 = arith.mulf %90, %95 : vector<2x32xf32>
    %97 = vector.broadcast %94 : vector<2x1xf32> to vector<2x32xf32>
    %98 = arith.mulf %97, %96 : vector<2x32xf32>
    %cst_27 = arith.constant 1.000000e+00 : f32
    %99 = vector.broadcast %cst_27 : f32 to vector<2x1xf32>
    %100 = arith.subf %99, %94 : vector<2x1xf32>
    %101 = vector.broadcast %100 : vector<2x1xf32> to vector<2x32xf32>
    %102 = arith.mulf %101, %46 : vector<2x32xf32>
    %103 = arith.addf %98, %102 : vector<2x32xf32>
    %104 = vector.broadcast %4 : vector<1x32xf32> to vector<2x32xf32>
    %105 = arith.mulf %103, %104 : vector<2x32xf32>
    %cst_28 = arith.constant dense<0.000000e+00> : vector<2xf32>
    %106 = vector.multi_reduction <add>, %105, %cst_28 [1] : vector<2x32xf32> to vector<2xf32>
    %107 = vector.shape_cast %106 : vector<2xf32> to vector<2x1xf32>
    %108 = vector.broadcast %5 : vector<1x1xf32> to vector<2x1xf32>
    %109 = arith.addf %107, %108 : vector<2x1xf32>
    %110 = arith.negf %109 : vector<2x1xf32>
    %111 = math.exp %110 : vector<2x1xf32>
    %cst_29 = arith.constant 1.000000e+00 : f32
    %112 = vector.broadcast %cst_29 : f32 to vector<2x1xf32>
    %113 = arith.addf %112, %111 : vector<2x1xf32>
    %114 = arith.divf %112, %113 : vector<2x1xf32>
    %115 = arith.mulf %94, %114 : vector<2x1xf32>
    %cst_30 = arith.constant 1.000000e+00 : f32
    %116 = vector.broadcast %cst_30 : f32 to vector<2x1xf32>
    %117 = arith.subf %116, %94 : vector<2x1xf32>
    %cst_31 = arith.constant 1.000000e+00 : f32
    %118 = vector.broadcast %cst_31 : f32 to vector<2x1xf32>
    %119 = arith.subf %118, %66 : vector<2x1xf32>
    %120 = arith.minimumf %114, %119 : vector<2x1xf32>
    %121 = arith.addf %66, %120 : vector<2x1xf32>
    %122 = arith.mulf %117, %121 : vector<2x1xf32>
    %123 = arith.addf %115, %122 : vector<2x1xf32>
    %124 = vector.extract_strided_slice %6 {offsets = [0, 2, 0], sizes = [2, 1, 128], strides = [1, 1, 1]} : vector<2x8x128xf32> to vector<2x1x128xf32>
    %125 = vector.shape_cast %124 : vector<2x1x128xf32> to vector<2x128xf32>
    %cst_32 = arith.constant dense<0.000000e+00> : vector<2x128xf32>
    %126 = tpu.matmul %103, %3, %cst_32 {dimension_numbers = #tpu.dot_dimension_numbers<[1], [0], [0], [1], [0, 0, 1, 1], [], []>} : vector<2x32xf32>, vector<32x128xf32>, vector<2x128xf32> -> vector<2x128xf32>
    %127 = arith.addf %125, %126 : vector<2x128xf32>
    %128 = vector.extract_strided_slice %127 {offsets = [0, 0], sizes = [2, 32], strides = [1, 1]} : vector<2x128xf32> to vector<2x32xf32>
    %129 = arith.negf %128 : vector<2x32xf32>
    %130 = math.exp %129 : vector<2x32xf32>
    %cst_33 = arith.constant 1.000000e+00 : f32
    %131 = vector.broadcast %cst_33 : f32 to vector<2x32xf32>
    %132 = arith.addf %131, %130 : vector<2x32xf32>
    %133 = arith.divf %131, %132 : vector<2x32xf32>
    %134 = vector.extract_strided_slice %127 {offsets = [0, 32], sizes = [2, 32], strides = [1, 1]} : vector<2x128xf32> to vector<2x32xf32>
    %135 = arith.negf %134 : vector<2x32xf32>
    %136 = math.exp %135 : vector<2x32xf32>
    %cst_34 = arith.constant 1.000000e+00 : f32
    %137 = vector.broadcast %cst_34 : f32 to vector<2x32xf32>
    %138 = arith.addf %137, %136 : vector<2x32xf32>
    %139 = arith.divf %137, %138 : vector<2x32xf32>
    %140 = vector.extract_strided_slice %127 {offsets = [0, 64], sizes = [2, 32], strides = [1, 1]} : vector<2x128xf32> to vector<2x32xf32>
    %141 = math.tanh %140 : vector<2x32xf32>
    %142 = vector.extract_strided_slice %127 {offsets = [0, 96], sizes = [2, 32], strides = [1, 1]} : vector<2x128xf32> to vector<2x32xf32>
    %143 = arith.negf %142 : vector<2x32xf32>
    %144 = math.exp %143 : vector<2x32xf32>
    %cst_35 = arith.constant 1.000000e+00 : f32
    %145 = vector.broadcast %cst_35 : f32 to vector<2x32xf32>
    %146 = arith.addf %145, %144 : vector<2x32xf32>
    %147 = arith.divf %145, %146 : vector<2x32xf32>
    %148 = arith.mulf %139, %93 : vector<2x32xf32>
    %149 = arith.mulf %133, %141 : vector<2x32xf32>
    %150 = arith.addf %148, %149 : vector<2x32xf32>
    %151 = math.roundeven %123 : vector<2x1xf32>
    %152 = math.tanh %150 : vector<2x32xf32>
    %153 = arith.mulf %147, %152 : vector<2x32xf32>
    %154 = vector.broadcast %151 : vector<2x1xf32> to vector<2x32xf32>
    %155 = arith.mulf %154, %153 : vector<2x32xf32>
    %cst_36 = arith.constant 1.000000e+00 : f32
    %156 = vector.broadcast %cst_36 : f32 to vector<2x1xf32>
    %157 = arith.subf %156, %151 : vector<2x1xf32>
    %158 = vector.broadcast %157 : vector<2x1xf32> to vector<2x32xf32>
    %159 = arith.mulf %158, %103 : vector<2x32xf32>
    %160 = arith.addf %155, %159 : vector<2x32xf32>
    %161 = vector.broadcast %4 : vector<1x32xf32> to vector<2x32xf32>
    %162 = arith.mulf %160, %161 : vector<2x32xf32>
    %cst_37 = arith.constant dense<0.000000e+00> : vector<2xf32>
    %163 = vector.multi_reduction <add>, %162, %cst_37 [1] : vector<2x32xf32> to vector<2xf32>
    %164 = vector.shape_cast %163 : vector<2xf32> to vector<2x1xf32>
    %165 = vector.broadcast %5 : vector<1x1xf32> to vector<2x1xf32>
    %166 = arith.addf %164, %165 : vector<2x1xf32>
    %167 = arith.negf %166 : vector<2x1xf32>
    %168 = math.exp %167 : vector<2x1xf32>
    %cst_38 = arith.constant 1.000000e+00 : f32
    %169 = vector.broadcast %cst_38 : f32 to vector<2x1xf32>
    %170 = arith.addf %169, %168 : vector<2x1xf32>
    %171 = arith.divf %169, %170 : vector<2x1xf32>
    %172 = arith.mulf %151, %171 : vector<2x1xf32>
    %cst_39 = arith.constant 1.000000e+00 : f32
    %173 = vector.broadcast %cst_39 : f32 to vector<2x1xf32>
    %174 = arith.subf %173, %151 : vector<2x1xf32>
    %cst_40 = arith.constant 1.000000e+00 : f32
    %175 = vector.broadcast %cst_40 : f32 to vector<2x1xf32>
    %176 = arith.subf %175, %123 : vector<2x1xf32>
    %177 = arith.minimumf %171, %176 : vector<2x1xf32>
    %178 = arith.addf %123, %177 : vector<2x1xf32>
    %179 = arith.mulf %174, %178 : vector<2x1xf32>
    %180 = arith.addf %172, %179 : vector<2x1xf32>
    %181 = vector.extract_strided_slice %6 {offsets = [0, 3, 0], sizes = [2, 1, 128], strides = [1, 1, 1]} : vector<2x8x128xf32> to vector<2x1x128xf32>
    %182 = vector.shape_cast %181 : vector<2x1x128xf32> to vector<2x128xf32>
    %cst_41 = arith.constant dense<0.000000e+00> : vector<2x128xf32>
    %183 = tpu.matmul %160, %3, %cst_41 {dimension_numbers = #tpu.dot_dimension_numbers<[1], [0], [0], [1], [0, 0, 1, 1], [], []>} : vector<2x32xf32>, vector<32x128xf32>, vector<2x128xf32> -> vector<2x128xf32>
    %184 = arith.addf %182, %183 : vector<2x128xf32>
    %185 = vector.extract_strided_slice %184 {offsets = [0, 0], sizes = [2, 32], strides = [1, 1]} : vector<2x128xf32> to vector<2x32xf32>
    %186 = arith.negf %185 : vector<2x32xf32>
    %187 = math.exp %186 : vector<2x32xf32>
    %cst_42 = arith.constant 1.000000e+00 : f32
    %188 = vector.broadcast %cst_42 : f32 to vector<2x32xf32>
    %189 = arith.addf %188, %187 : vector<2x32xf32>
    %190 = arith.divf %188, %189 : vector<2x32xf32>
    %191 = vector.extract_strided_slice %184 {offsets = [0, 32], sizes = [2, 32], strides = [1, 1]} : vector<2x128xf32> to vector<2x32xf32>
    %192 = arith.negf %191 : vector<2x32xf32>
    %193 = math.exp %192 : vector<2x32xf32>
    %cst_43 = arith.constant 1.000000e+00 : f32
    %194 = vector.broadcast %cst_43 : f32 to vector<2x32xf32>
    %195 = arith.addf %194, %193 : vector<2x32xf32>
    %196 = arith.divf %194, %195 : vector<2x32xf32>
    %197 = vector.extract_strided_slice %184 {offsets = [0, 64], sizes = [2, 32], strides = [1, 1]} : vector<2x128xf32> to vector<2x32xf32>
    %198 = math.tanh %197 : vector<2x32xf32>
    %199 = vector.extract_strided_slice %184 {offsets = [0, 96], sizes = [2, 32], strides = [1, 1]} : vector<2x128xf32> to vector<2x32xf32>
    %200 = arith.negf %199 : vector<2x32xf32>
    %201 = math.exp %200 : vector<2x32xf32>
    %cst_44 = arith.constant 1.000000e+00 : f32
    %202 = vector.broadcast %cst_44 : f32 to vector<2x32xf32>
    %203 = arith.addf %202, %201 : vector<2x32xf32>
    %204 = arith.divf %202, %203 : vector<2x32xf32>
    %205 = arith.mulf %196, %150 : vector<2x32xf32>
    %206 = arith.mulf %190, %198 : vector<2x32xf32>
    %207 = arith.addf %205, %206 : vector<2x32xf32>
    %208 = math.roundeven %180 : vector<2x1xf32>
    %209 = math.tanh %207 : vector<2x32xf32>
    %210 = arith.mulf %204, %209 : vector<2x32xf32>
    %211 = vector.broadcast %208 : vector<2x1xf32> to vector<2x32xf32>
    %212 = arith.mulf %211, %210 : vector<2x32xf32>
    %cst_45 = arith.constant 1.000000e+00 : f32
    %213 = vector.broadcast %cst_45 : f32 to vector<2x1xf32>
    %214 = arith.subf %213, %208 : vector<2x1xf32>
    %215 = vector.broadcast %214 : vector<2x1xf32> to vector<2x32xf32>
    %216 = arith.mulf %215, %160 : vector<2x32xf32>
    %217 = arith.addf %212, %216 : vector<2x32xf32>
    %218 = vector.broadcast %4 : vector<1x32xf32> to vector<2x32xf32>
    %219 = arith.mulf %217, %218 : vector<2x32xf32>
    %cst_46 = arith.constant dense<0.000000e+00> : vector<2xf32>
    %220 = vector.multi_reduction <add>, %219, %cst_46 [1] : vector<2x32xf32> to vector<2xf32>
    %221 = vector.shape_cast %220 : vector<2xf32> to vector<2x1xf32>
    %222 = vector.broadcast %5 : vector<1x1xf32> to vector<2x1xf32>
    %223 = arith.addf %221, %222 : vector<2x1xf32>
    %224 = arith.negf %223 : vector<2x1xf32>
    %225 = math.exp %224 : vector<2x1xf32>
    %cst_47 = arith.constant 1.000000e+00 : f32
    %226 = vector.broadcast %cst_47 : f32 to vector<2x1xf32>
    %227 = arith.addf %226, %225 : vector<2x1xf32>
    %228 = arith.divf %226, %227 : vector<2x1xf32>
    %229 = arith.mulf %208, %228 : vector<2x1xf32>
    %cst_48 = arith.constant 1.000000e+00 : f32
    %230 = vector.broadcast %cst_48 : f32 to vector<2x1xf32>
    %231 = arith.subf %230, %208 : vector<2x1xf32>
    %cst_49 = arith.constant 1.000000e+00 : f32
    %232 = vector.broadcast %cst_49 : f32 to vector<2x1xf32>
    %233 = arith.subf %232, %180 : vector<2x1xf32>
    %234 = arith.minimumf %228, %233 : vector<2x1xf32>
    %235 = arith.addf %180, %234 : vector<2x1xf32>
    %236 = arith.mulf %231, %235 : vector<2x1xf32>
    %237 = arith.addf %229, %236 : vector<2x1xf32>
    %238 = vector.extract_strided_slice %6 {offsets = [0, 4, 0], sizes = [2, 1, 128], strides = [1, 1, 1]} : vector<2x8x128xf32> to vector<2x1x128xf32>
    %239 = vector.shape_cast %238 : vector<2x1x128xf32> to vector<2x128xf32>
    %cst_50 = arith.constant dense<0.000000e+00> : vector<2x128xf32>
    %240 = tpu.matmul %217, %3, %cst_50 {dimension_numbers = #tpu.dot_dimension_numbers<[1], [0], [0], [1], [0, 0, 1, 1], [], []>} : vector<2x32xf32>, vector<32x128xf32>, vector<2x128xf32> -> vector<2x128xf32>
    %241 = arith.addf %239, %240 : vector<2x128xf32>
    %242 = vector.extract_strided_slice %241 {offsets = [0, 0], sizes = [2, 32], strides = [1, 1]} : vector<2x128xf32> to vector<2x32xf32>
    %243 = arith.negf %242 : vector<2x32xf32>
    %244 = math.exp %243 : vector<2x32xf32>
    %cst_51 = arith.constant 1.000000e+00 : f32
    %245 = vector.broadcast %cst_51 : f32 to vector<2x32xf32>
    %246 = arith.addf %245, %244 : vector<2x32xf32>
    %247 = arith.divf %245, %246 : vector<2x32xf32>
    %248 = vector.extract_strided_slice %241 {offsets = [0, 32], sizes = [2, 32], strides = [1, 1]} : vector<2x128xf32> to vector<2x32xf32>
    %249 = arith.negf %248 : vector<2x32xf32>
    %250 = math.exp %249 : vector<2x32xf32>
    %cst_52 = arith.constant 1.000000e+00 : f32
    %251 = vector.broadcast %cst_52 : f32 to vector<2x32xf32>
    %252 = arith.addf %251, %250 : vector<2x32xf32>
    %253 = arith.divf %251, %252 : vector<2x32xf32>
    %254 = vector.extract_strided_slice %241 {offsets = [0, 64], sizes = [2, 32], strides = [1, 1]} : vector<2x128xf32> to vector<2x32xf32>
    %255 = math.tanh %254 : vector<2x32xf32>
    %256 = vector.extract_strided_slice %241 {offsets = [0, 96], sizes = [2, 32], strides = [1, 1]} : vector<2x128xf32> to vector<2x32xf32>
    %257 = arith.negf %256 : vector<2x32xf32>
    %258 = math.exp %257 : vector<2x32xf32>
    %cst_53 = arith.constant 1.000000e+00 : f32
    %259 = vector.broadcast %cst_53 : f32 to vector<2x32xf32>
    %260 = arith.addf %259, %258 : vector<2x32xf32>
    %261 = arith.divf %259, %260 : vector<2x32xf32>
    %262 = arith.mulf %253, %207 : vector<2x32xf32>
    %263 = arith.mulf %247, %255 : vector<2x32xf32>
    %264 = arith.addf %262, %263 : vector<2x32xf32>
    %265 = math.roundeven %237 : vector<2x1xf32>
    %266 = math.tanh %264 : vector<2x32xf32>
    %267 = arith.mulf %261, %266 : vector<2x32xf32>
    %268 = vector.broadcast %265 : vector<2x1xf32> to vector<2x32xf32>
    %269 = arith.mulf %268, %267 : vector<2x32xf32>
    %cst_54 = arith.constant 1.000000e+00 : f32
    %270 = vector.broadcast %cst_54 : f32 to vector<2x1xf32>
    %271 = arith.subf %270, %265 : vector<2x1xf32>
    %272 = vector.broadcast %271 : vector<2x1xf32> to vector<2x32xf32>
    %273 = arith.mulf %272, %217 : vector<2x32xf32>
    %274 = arith.addf %269, %273 : vector<2x32xf32>
    %275 = vector.broadcast %4 : vector<1x32xf32> to vector<2x32xf32>
    %276 = arith.mulf %274, %275 : vector<2x32xf32>
    %cst_55 = arith.constant dense<0.000000e+00> : vector<2xf32>
    %277 = vector.multi_reduction <add>, %276, %cst_55 [1] : vector<2x32xf32> to vector<2xf32>
    %278 = vector.shape_cast %277 : vector<2xf32> to vector<2x1xf32>
    %279 = vector.broadcast %5 : vector<1x1xf32> to vector<2x1xf32>
    %280 = arith.addf %278, %279 : vector<2x1xf32>
    %281 = arith.negf %280 : vector<2x1xf32>
    %282 = math.exp %281 : vector<2x1xf32>
    %cst_56 = arith.constant 1.000000e+00 : f32
    %283 = vector.broadcast %cst_56 : f32 to vector<2x1xf32>
    %284 = arith.addf %283, %282 : vector<2x1xf32>
    %285 = arith.divf %283, %284 : vector<2x1xf32>
    %286 = arith.mulf %265, %285 : vector<2x1xf32>
    %cst_57 = arith.constant 1.000000e+00 : f32
    %287 = vector.broadcast %cst_57 : f32 to vector<2x1xf32>
    %288 = arith.subf %287, %265 : vector<2x1xf32>
    %cst_58 = arith.constant 1.000000e+00 : f32
    %289 = vector.broadcast %cst_58 : f32 to vector<2x1xf32>
    %290 = arith.subf %289, %237 : vector<2x1xf32>
    %291 = arith.minimumf %285, %290 : vector<2x1xf32>
    %292 = arith.addf %237, %291 : vector<2x1xf32>
    %293 = arith.mulf %288, %292 : vector<2x1xf32>
    %294 = arith.addf %286, %293 : vector<2x1xf32>
    %295 = vector.extract_strided_slice %6 {offsets = [0, 5, 0], sizes = [2, 1, 128], strides = [1, 1, 1]} : vector<2x8x128xf32> to vector<2x1x128xf32>
    %296 = vector.shape_cast %295 : vector<2x1x128xf32> to vector<2x128xf32>
    %cst_59 = arith.constant dense<0.000000e+00> : vector<2x128xf32>
    %297 = tpu.matmul %274, %3, %cst_59 {dimension_numbers = #tpu.dot_dimension_numbers<[1], [0], [0], [1], [0, 0, 1, 1], [], []>} : vector<2x32xf32>, vector<32x128xf32>, vector<2x128xf32> -> vector<2x128xf32>
    %298 = arith.addf %296, %297 : vector<2x128xf32>
    %299 = vector.extract_strided_slice %298 {offsets = [0, 0], sizes = [2, 32], strides = [1, 1]} : vector<2x128xf32> to vector<2x32xf32>
    %300 = arith.negf %299 : vector<2x32xf32>
    %301 = math.exp %300 : vector<2x32xf32>
    %cst_60 = arith.constant 1.000000e+00 : f32
    %302 = vector.broadcast %cst_60 : f32 to vector<2x32xf32>
    %303 = arith.addf %302, %301 : vector<2x32xf32>
    %304 = arith.divf %302, %303 : vector<2x32xf32>
    %305 = vector.extract_strided_slice %298 {offsets = [0, 32], sizes = [2, 32], strides = [1, 1]} : vector<2x128xf32> to vector<2x32xf32>
    %306 = arith.negf %305 : vector<2x32xf32>
    %307 = math.exp %306 : vector<2x32xf32>
    %cst_61 = arith.constant 1.000000e+00 : f32
    %308 = vector.broadcast %cst_61 : f32 to vector<2x32xf32>
    %309 = arith.addf %308, %307 : vector<2x32xf32>
    %310 = arith.divf %308, %309 : vector<2x32xf32>
    %311 = vector.extract_strided_slice %298 {offsets = [0, 64], sizes = [2, 32], strides = [1, 1]} : vector<2x128xf32> to vector<2x32xf32>
    %312 = math.tanh %311 : vector<2x32xf32>
    %313 = vector.extract_strided_slice %298 {offsets = [0, 96], sizes = [2, 32], strides = [1, 1]} : vector<2x128xf32> to vector<2x32xf32>
    %314 = arith.negf %313 : vector<2x32xf32>
    %315 = math.exp %314 : vector<2x32xf32>
    %cst_62 = arith.constant 1.000000e+00 : f32
    %316 = vector.broadcast %cst_62 : f32 to vector<2x32xf32>
    %317 = arith.addf %316, %315 : vector<2x32xf32>
    %318 = arith.divf %316, %317 : vector<2x32xf32>
    %319 = arith.mulf %310, %264 : vector<2x32xf32>
    %320 = arith.mulf %304, %312 : vector<2x32xf32>
    %321 = arith.addf %319, %320 : vector<2x32xf32>
    %322 = math.roundeven %294 : vector<2x1xf32>
    %323 = math.tanh %321 : vector<2x32xf32>
    %324 = arith.mulf %318, %323 : vector<2x32xf32>
    %325 = vector.broadcast %322 : vector<2x1xf32> to vector<2x32xf32>
    %326 = arith.mulf %325, %324 : vector<2x32xf32>
    %cst_63 = arith.constant 1.000000e+00 : f32
    %327 = vector.broadcast %cst_63 : f32 to vector<2x1xf32>
    %328 = arith.subf %327, %322 : vector<2x1xf32>
    %329 = vector.broadcast %328 : vector<2x1xf32> to vector<2x32xf32>
    %330 = arith.mulf %329, %274 : vector<2x32xf32>
    %331 = arith.addf %326, %330 : vector<2x32xf32>
    %332 = vector.broadcast %4 : vector<1x32xf32> to vector<2x32xf32>
    %333 = arith.mulf %331, %332 : vector<2x32xf32>
    %cst_64 = arith.constant dense<0.000000e+00> : vector<2xf32>
    %334 = vector.multi_reduction <add>, %333, %cst_64 [1] : vector<2x32xf32> to vector<2xf32>
    %335 = vector.shape_cast %334 : vector<2xf32> to vector<2x1xf32>
    %336 = vector.broadcast %5 : vector<1x1xf32> to vector<2x1xf32>
    %337 = arith.addf %335, %336 : vector<2x1xf32>
    %338 = arith.negf %337 : vector<2x1xf32>
    %339 = math.exp %338 : vector<2x1xf32>
    %cst_65 = arith.constant 1.000000e+00 : f32
    %340 = vector.broadcast %cst_65 : f32 to vector<2x1xf32>
    %341 = arith.addf %340, %339 : vector<2x1xf32>
    %342 = arith.divf %340, %341 : vector<2x1xf32>
    %343 = arith.mulf %322, %342 : vector<2x1xf32>
    %cst_66 = arith.constant 1.000000e+00 : f32
    %344 = vector.broadcast %cst_66 : f32 to vector<2x1xf32>
    %345 = arith.subf %344, %322 : vector<2x1xf32>
    %cst_67 = arith.constant 1.000000e+00 : f32
    %346 = vector.broadcast %cst_67 : f32 to vector<2x1xf32>
    %347 = arith.subf %346, %294 : vector<2x1xf32>
    %348 = arith.minimumf %342, %347 : vector<2x1xf32>
    %349 = arith.addf %294, %348 : vector<2x1xf32>
    %350 = arith.mulf %345, %349 : vector<2x1xf32>
    %351 = arith.addf %343, %350 : vector<2x1xf32>
    %352 = vector.extract_strided_slice %6 {offsets = [0, 6, 0], sizes = [2, 1, 128], strides = [1, 1, 1]} : vector<2x8x128xf32> to vector<2x1x128xf32>
    %353 = vector.shape_cast %352 : vector<2x1x128xf32> to vector<2x128xf32>
    %cst_68 = arith.constant dense<0.000000e+00> : vector<2x128xf32>
    %354 = tpu.matmul %331, %3, %cst_68 {dimension_numbers = #tpu.dot_dimension_numbers<[1], [0], [0], [1], [0, 0, 1, 1], [], []>} : vector<2x32xf32>, vector<32x128xf32>, vector<2x128xf32> -> vector<2x128xf32>
    %355 = arith.addf %353, %354 : vector<2x128xf32>
    %356 = vector.extract_strided_slice %355 {offsets = [0, 0], sizes = [2, 32], strides = [1, 1]} : vector<2x128xf32> to vector<2x32xf32>
    %357 = arith.negf %356 : vector<2x32xf32>
    %358 = math.exp %357 : vector<2x32xf32>
    %cst_69 = arith.constant 1.000000e+00 : f32
    %359 = vector.broadcast %cst_69 : f32 to vector<2x32xf32>
    %360 = arith.addf %359, %358 : vector<2x32xf32>
    %361 = arith.divf %359, %360 : vector<2x32xf32>
    %362 = vector.extract_strided_slice %355 {offsets = [0, 32], sizes = [2, 32], strides = [1, 1]} : vector<2x128xf32> to vector<2x32xf32>
    %363 = arith.negf %362 : vector<2x32xf32>
    %364 = math.exp %363 : vector<2x32xf32>
    %cst_70 = arith.constant 1.000000e+00 : f32
    %365 = vector.broadcast %cst_70 : f32 to vector<2x32xf32>
    %366 = arith.addf %365, %364 : vector<2x32xf32>
    %367 = arith.divf %365, %366 : vector<2x32xf32>
    %368 = vector.extract_strided_slice %355 {offsets = [0, 64], sizes = [2, 32], strides = [1, 1]} : vector<2x128xf32> to vector<2x32xf32>
    %369 = math.tanh %368 : vector<2x32xf32>
    %370 = vector.extract_strided_slice %355 {offsets = [0, 96], sizes = [2, 32], strides = [1, 1]} : vector<2x128xf32> to vector<2x32xf32>
    %371 = arith.negf %370 : vector<2x32xf32>
    %372 = math.exp %371 : vector<2x32xf32>
    %cst_71 = arith.constant 1.000000e+00 : f32
    %373 = vector.broadcast %cst_71 : f32 to vector<2x32xf32>
    %374 = arith.addf %373, %372 : vector<2x32xf32>
    %375 = arith.divf %373, %374 : vector<2x32xf32>
    %376 = arith.mulf %367, %321 : vector<2x32xf32>
    %377 = arith.mulf %361, %369 : vector<2x32xf32>
    %378 = arith.addf %376, %377 : vector<2x32xf32>
    %379 = math.roundeven %351 : vector<2x1xf32>
    %380 = math.tanh %378 : vector<2x32xf32>
    %381 = arith.mulf %375, %380 : vector<2x32xf32>
    %382 = vector.broadcast %379 : vector<2x1xf32> to vector<2x32xf32>
    %383 = arith.mulf %382, %381 : vector<2x32xf32>
    %cst_72 = arith.constant 1.000000e+00 : f32
    %384 = vector.broadcast %cst_72 : f32 to vector<2x1xf32>
    %385 = arith.subf %384, %379 : vector<2x1xf32>
    %386 = vector.broadcast %385 : vector<2x1xf32> to vector<2x32xf32>
    %387 = arith.mulf %386, %331 : vector<2x32xf32>
    %388 = arith.addf %383, %387 : vector<2x32xf32>
    %389 = vector.broadcast %4 : vector<1x32xf32> to vector<2x32xf32>
    %390 = arith.mulf %388, %389 : vector<2x32xf32>
    %cst_73 = arith.constant dense<0.000000e+00> : vector<2xf32>
    %391 = vector.multi_reduction <add>, %390, %cst_73 [1] : vector<2x32xf32> to vector<2xf32>
    %392 = vector.shape_cast %391 : vector<2xf32> to vector<2x1xf32>
    %393 = vector.broadcast %5 : vector<1x1xf32> to vector<2x1xf32>
    %394 = arith.addf %392, %393 : vector<2x1xf32>
    %395 = arith.negf %394 : vector<2x1xf32>
    %396 = math.exp %395 : vector<2x1xf32>
    %cst_74 = arith.constant 1.000000e+00 : f32
    %397 = vector.broadcast %cst_74 : f32 to vector<2x1xf32>
    %398 = arith.addf %397, %396 : vector<2x1xf32>
    %399 = arith.divf %397, %398 : vector<2x1xf32>
    %400 = arith.mulf %379, %399 : vector<2x1xf32>
    %cst_75 = arith.constant 1.000000e+00 : f32
    %401 = vector.broadcast %cst_75 : f32 to vector<2x1xf32>
    %402 = arith.subf %401, %379 : vector<2x1xf32>
    %cst_76 = arith.constant 1.000000e+00 : f32
    %403 = vector.broadcast %cst_76 : f32 to vector<2x1xf32>
    %404 = arith.subf %403, %351 : vector<2x1xf32>
    %405 = arith.minimumf %399, %404 : vector<2x1xf32>
    %406 = arith.addf %351, %405 : vector<2x1xf32>
    %407 = arith.mulf %402, %406 : vector<2x1xf32>
    %408 = arith.addf %400, %407 : vector<2x1xf32>
    %409 = vector.extract_strided_slice %6 {offsets = [0, 7, 0], sizes = [2, 1, 128], strides = [1, 1, 1]} : vector<2x8x128xf32> to vector<2x1x128xf32>
    %410 = vector.shape_cast %409 : vector<2x1x128xf32> to vector<2x128xf32>
    %cst_77 = arith.constant dense<0.000000e+00> : vector<2x128xf32>
    %411 = tpu.matmul %388, %3, %cst_77 {dimension_numbers = #tpu.dot_dimension_numbers<[1], [0], [0], [1], [0, 0, 1, 1], [], []>} : vector<2x32xf32>, vector<32x128xf32>, vector<2x128xf32> -> vector<2x128xf32>
    %412 = arith.addf %410, %411 : vector<2x128xf32>
    %413 = vector.extract_strided_slice %412 {offsets = [0, 0], sizes = [2, 32], strides = [1, 1]} : vector<2x128xf32> to vector<2x32xf32>
    %414 = arith.negf %413 : vector<2x32xf32>
    %415 = math.exp %414 : vector<2x32xf32>
    %cst_78 = arith.constant 1.000000e+00 : f32
    %416 = vector.broadcast %cst_78 : f32 to vector<2x32xf32>
    %417 = arith.addf %416, %415 : vector<2x32xf32>
    %418 = arith.divf %416, %417 : vector<2x32xf32>
    %419 = vector.extract_strided_slice %412 {offsets = [0, 32], sizes = [2, 32], strides = [1, 1]} : vector<2x128xf32> to vector<2x32xf32>
    %420 = arith.negf %419 : vector<2x32xf32>
    %421 = math.exp %420 : vector<2x32xf32>
    %cst_79 = arith.constant 1.000000e+00 : f32
    %422 = vector.broadcast %cst_79 : f32 to vector<2x32xf32>
    %423 = arith.addf %422, %421 : vector<2x32xf32>
    %424 = arith.divf %422, %423 : vector<2x32xf32>
    %425 = vector.extract_strided_slice %412 {offsets = [0, 64], sizes = [2, 32], strides = [1, 1]} : vector<2x128xf32> to vector<2x32xf32>
    %426 = math.tanh %425 : vector<2x32xf32>
    %427 = vector.extract_strided_slice %412 {offsets = [0, 96], sizes = [2, 32], strides = [1, 1]} : vector<2x128xf32> to vector<2x32xf32>
    %428 = arith.negf %427 : vector<2x32xf32>
    %429 = math.exp %428 : vector<2x32xf32>
    %cst_80 = arith.constant 1.000000e+00 : f32
    %430 = vector.broadcast %cst_80 : f32 to vector<2x32xf32>
    %431 = arith.addf %430, %429 : vector<2x32xf32>
    %432 = arith.divf %430, %431 : vector<2x32xf32>
    %433 = arith.mulf %424, %378 : vector<2x32xf32>
    %434 = arith.mulf %418, %426 : vector<2x32xf32>
    %435 = arith.addf %433, %434 : vector<2x32xf32>
    %436 = math.roundeven %408 : vector<2x1xf32>
    %437 = math.tanh %435 : vector<2x32xf32>
    %438 = arith.mulf %432, %437 : vector<2x32xf32>
    %439 = vector.broadcast %436 : vector<2x1xf32> to vector<2x32xf32>
    %440 = arith.mulf %439, %438 : vector<2x32xf32>
    %cst_81 = arith.constant 1.000000e+00 : f32
    %441 = vector.broadcast %cst_81 : f32 to vector<2x1xf32>
    %442 = arith.subf %441, %436 : vector<2x1xf32>
    %443 = vector.broadcast %442 : vector<2x1xf32> to vector<2x32xf32>
    %444 = arith.mulf %443, %388 : vector<2x32xf32>
    %445 = arith.addf %440, %444 : vector<2x32xf32>
    %446 = vector.broadcast %4 : vector<1x32xf32> to vector<2x32xf32>
    %447 = arith.mulf %445, %446 : vector<2x32xf32>
    %cst_82 = arith.constant dense<0.000000e+00> : vector<2xf32>
    %448 = vector.multi_reduction <add>, %447, %cst_82 [1] : vector<2x32xf32> to vector<2xf32>
    %449 = vector.shape_cast %448 : vector<2xf32> to vector<2x1xf32>
    %450 = vector.broadcast %5 : vector<1x1xf32> to vector<2x1xf32>
    %451 = arith.addf %449, %450 : vector<2x1xf32>
    %452 = arith.negf %451 : vector<2x1xf32>
    %453 = math.exp %452 : vector<2x1xf32>
    %cst_83 = arith.constant 1.000000e+00 : f32
    %454 = vector.broadcast %cst_83 : f32 to vector<2x1xf32>
    %455 = arith.addf %454, %453 : vector<2x1xf32>
    %456 = arith.divf %454, %455 : vector<2x1xf32>
    %457 = arith.mulf %436, %456 : vector<2x1xf32>
    %cst_84 = arith.constant 1.000000e+00 : f32
    %458 = vector.broadcast %cst_84 : f32 to vector<2x1xf32>
    %459 = arith.subf %458, %436 : vector<2x1xf32>
    %cst_85 = arith.constant 1.000000e+00 : f32
    %460 = vector.broadcast %cst_85 : f32 to vector<2x1xf32>
    %461 = arith.subf %460, %408 : vector<2x1xf32>
    %462 = arith.minimumf %456, %461 : vector<2x1xf32>
    %463 = arith.addf %408, %462 : vector<2x1xf32>
    %464 = arith.mulf %459, %463 : vector<2x1xf32>
    %465 = arith.addf %457, %464 : vector<2x1xf32>
    %466 = vector.shape_cast %46 : vector<2x32xf32> to vector<2x1x32xf32>
    %467 = vector.shape_cast %103 : vector<2x32xf32> to vector<2x1x32xf32>
    %468 = vector.shape_cast %160 : vector<2x32xf32> to vector<2x1x32xf32>
    %469 = vector.shape_cast %217 : vector<2x32xf32> to vector<2x1x32xf32>
    %470 = vector.shape_cast %274 : vector<2x32xf32> to vector<2x1x32xf32>
    %471 = vector.shape_cast %331 : vector<2x32xf32> to vector<2x1x32xf32>
    %472 = vector.shape_cast %388 : vector<2x32xf32> to vector<2x1x32xf32>
    %473 = vector.shape_cast %445 : vector<2x32xf32> to vector<2x1x32xf32>
    %474 = tpu.concatenate %466, %467, %468, %469, %470, %471, %472, %473 in 1 : vector<2x1x32xf32>, vector<2x1x32xf32>, vector<2x1x32xf32>, vector<2x1x32xf32>, vector<2x1x32xf32>, vector<2x1x32xf32>, vector<2x1x32xf32>, vector<2x1x32xf32> -> vector<2x8x32xf32>
    %c0_86 = arith.constant 0 : index
    %c0_87 = arith.constant 0 : index
    %c0_88 = arith.constant 0 : index
    %475 = vector.load %arg5[%c0_86, %c0_87, %c0_88] : memref<2x8x32xf32, #tpu.memory_space<vmem>>, vector<2x8x32xf32>
    tpu.vector_store %arg5[%c0_86, %c0_87, %c0_88], %474 {strides = array<i32>} : memref<2x8x32xf32, #tpu.memory_space<vmem>>, vector<2x8x32xf32>,
    %c0_89 = arith.constant 0 : index
    %c0_90 = arith.constant 0 : index
    %476 = vector.load %arg9[%c0_89, %c0_90] : memref<2x32xf32, #tpu.memory_space<vmem>>, vector<2x32xf32>
    tpu.vector_store %arg9[%c0_89, %c0_90], %445 {strides = array<i32>} : memref<2x32xf32, #tpu.memory_space<vmem>>, vector<2x32xf32>,
    %c0_91 = arith.constant 0 : index
    %c0_92 = arith.constant 0 : index
    %477 = vector.load %arg10[%c0_91, %c0_92] : memref<2x32xf32, #tpu.memory_space<vmem>>, vector<2x32xf32>
    tpu.vector_store %arg10[%c0_91, %c0_92], %435 {strides = array<i32>} : memref<2x32xf32, #tpu.memory_space<vmem>>, vector<2x32xf32>,
    %c0_93 = arith.constant 0 : index
    %c0_94 = arith.constant 0 : index
    %478 = vector.load %arg11[%c0_93, %c0_94] : memref<2x1xf32, #tpu.memory_space<vmem>>, vector<2x1xf32>
    tpu.vector_store %arg11[%c0_93, %c0_94], %465 {strides = array<i32>} : memref<2x1xf32, #tpu.memory_space<vmem>>, vector<2x1xf32>,
    %c0_i32_95 = arith.constant 0 : i32
    %479 = arith.cmpi eq, %arg0, %c0_i32_95 : i32
    %480 = arith.extui %479 : i1 to i32
    %c0_i32_96 = arith.constant 0 : i32
    %481 = arith.cmpi ne, %480, %c0_i32_96 : i32
    scf.if %481 {
      %c0_97 = arith.constant 0 : index
      %c0_98 = arith.constant 0 : index
      %482 = vector.load %arg6[%c0_97, %c0_98] : memref<2x32xf32, #tpu.memory_space<vmem>>, vector<2x32xf32>
      tpu.vector_store %arg6[%c0_97, %c0_98], %445 {strides = array<i32>} : memref<2x32xf32, #tpu.memory_space<vmem>>, vector<2x32xf32>,
      %c0_99 = arith.constant 0 : index
      %c0_100 = arith.constant 0 : index
      %483 = vector.load %arg7[%c0_99, %c0_100] : memref<2x32xf32, #tpu.memory_space<vmem>>, vector<2x32xf32>
      tpu.vector_store %arg7[%c0_99, %c0_100], %435 {strides = array<i32>} : memref<2x32xf32, #tpu.memory_space<vmem>>, vector<2x32xf32>,
      %c0_101 = arith.constant 0 : index
      %c0_102 = arith.constant 0 : index
      %484 = vector.load %arg8[%c0_101, %c0_102] : memref<2x1xf32, #tpu.memory_space<vmem>>, vector<2x1xf32>
      tpu.vector_store %arg8[%c0_101, %c0_102], %465 {strides = array<i32>} : memref<2x1xf32, #tpu.memory_space<vmem>>, vector<2x1xf32>,
    } else {
    }
    return
  }
  func.func @transform_0(%arg0: i32) -> (i32, i32, i32) {
    %c0_i32 = arith.constant 0 : i32
    %c0_i32_0 = arith.constant 0 : i32
    %c0_i32_1 = arith.constant 0 : i32
    return %c0_i32, %arg0, %c0_i32_0 : i32, i32, i32
  }
  func.func @transform_1(%arg0: i32) -> (i32, i32) {
    %c0_i32 = arith.constant 0 : i32
    %c0_i32_0 = arith.constant 0 : i32
    %c0_i32_1 = arith.constant 0 : i32
    return %c0_i32, %c0_i32_0 : i32, i32
  }
  func.func @transform_2(%arg0: i32) -> (i32, i32) {
    %c0_i32 = arith.constant 0 : i32
    %c0_i32_0 = arith.constant 0 : i32
    %c0_i32_1 = arith.constant 0 : i32
    return %c0_i32, %c0_i32_0 : i32, i32
  }
  func.func @transform_3(%arg0: i32) -> (i32, i32) {
    %c0_i32 = arith.constant 0 : i32
    %c0_i32_0 = arith.constant 0 : i32
    %c0_i32_1 = arith.constant 0 : i32
    return %c0_i32, %c0_i32_0 : i32, i32
  }
  func.func @transform_4(%arg0: i32) -> (i32, i32, i32) {
    %c0_i32 = arith.constant 0 : i32
    %c0_i32_0 = arith.constant 0 : i32
    %c0_i32_1 = arith.constant 0 : i32
    return %c0_i32, %arg0, %c0_i32_0 : i32, i32, i32
  }
  func.func @transform_5(%arg0: i32) -> (i32, i32) {
    %c0_i32 = arith.constant 0 : i32
    %c0_i32_0 = arith.constant 0 : i32
    %c0_i32_1 = arith.constant 0 : i32
    return %c0_i32, %c0_i32_0 : i32, i32
  }
  func.func @transform_6(%arg0: i32) -> (i32, i32) {
    %c0_i32 = arith.constant 0 : i32
    %c0_i32_0 = arith.constant 0 : i32
    %c0_i32_1 = arith.constant 0 : i32
    return %c0_i32, %c0_i32_0 : i32, i32
  }
  func.func @transform_7(%arg0: i32) -> (i32, i32) {
    %c0_i32 = arith.constant 0 : i32
    %c0_i32_0 = arith.constant 0 : i32
    %c0_i32_1 = arith.constant 0 : i32
    return %c0_i32, %c0_i32_0 : i32, i32
  }
}

</mosaic_0001>

<llo_original>
// kernel: tpu_custom_call.1
$region0: #{tpu_custom_call.1}
  #allocation0 [shape = 'u32[]', space=smem, size = 0x4, offset = 0x4, fixed_abs, tag = 'smem constant byte address 0x4 - core index']
  #allocation1 [shape = 'u32[144,128]{1,0:T(1,128)}', space=vmem, size = 0x12000, scoped, tag = 'internal scratch']
  #allocation2 [shape = 'f32[2,32]{1,0:T(2,128)}', space=vmem, size = 0x400, scoped, tag = 'scratch operand']
  #allocation3 [shape = 'f32[2,32]{1,0:T(2,128)}', space=vmem, size = 0x400, scoped, tag = 'scratch operand']
  #allocation4 [shape = 'f32[2,1]{1,0:T(2,128)}', space=vmem, size = 0x400, scoped, tag = 'scratch operand']
  #allocation5 [shape = 'f32[1,1]{1,0:T(1,128)S(1)}', space=vmem, size = 0x200, scoped, tag = 'scoped memory for tpu_custom_call.1']
  %s0 = inlined_call_operand.hbm [shape: f32[2,8,128], index: 0, kind: input, shape index: {}]
  %s1 = inlined_call_operand.hbm [shape: f32[32,128], index: 1, kind: input, shape index: {}]
  %s2 = inlined_call_operand.vmem [shape: f32[1,32], index: 2, kind: input, shape index: {}]
  %s3 = inlined_call_operand.<no memory space> [shape: f32[1,1], index: 3, kind: input, shape index: {}]
  %s4 = inlined_call_operand.hbm [shape: f32[2,8,32], index: 4, kind: output, shape index: {0}]
  %s5 = inlined_call_operand.hbm [shape: f32[2,32], index: 5, kind: output, shape index: {1}]
  %s6 = inlined_call_operand.hbm [shape: f32[2,32], index: 6, kind: output, shape index: {2}]
  %s7 = inlined_call_operand.vmem [shape: f32[2,1], index: 7, kind: output, shape index: {3}]
  %8 = xla_tuple %s4, %s5, %s6, %s7
  %s9 = sld [smem:[#allocation0]]
  $region66: #{tpu_custom_call.1} parent=0
    _
  %s11 = ssub.s32 1, %s9
  %s12 = scalar_select 0, %s11, %s9
  %v13 = vstv %s3
  %14 = vst [vmem:[#allocation5] sm:$0x1] %v13
  $region1: #{tpu_custom_call.1} parent=0
    #allocation6 [shape = 'u8[8192]{0}', space=vmem, size = 0x2000, scoped, tag = 'input window, operand 0, single buffered']
    #allocation7 [shape = 's32[1]{0}', space=sflag, size = 0x4, scoped, tag = 'scoped memory for tpu_custom_call.1']
    #allocation8 [shape = 's32[1]{0}', space=sflag, size = 0x4, scoped, tag = 'scoped memory for tpu_custom_call.1']
    #allocation9 [shape = 'u8[16384]{0}', space=vmem, size = 0x4000, scoped, tag = 'input window, operand 1, single buffered']
    #allocation10 [shape = 's32[1]{0}', space=sflag, size = 0x4, scoped, tag = 'scoped memory for tpu_custom_call.1']
    #allocation11 [shape = 'u8[8192]{0}', space=vmem, size = 0x2000, scoped, tag = 'output window, operand 0, single buffered']
    #allocation12 [shape = 'u8[1024]{0}', space=vmem, size = 0x400, scoped, tag = 'output window, operand 1, single buffered']
    #allocation13 [shape = 's32[1]{0}', space=sflag, size = 0x4, scoped, tag = 'scoped memory for tpu_custom_call.1']
    #allocation14 [shape = 'u8[1024]{0}', space=vmem, size = 0x400, scoped, tag = 'output window, operand 2, single buffered']
    %15 = vsyncpa [#allocation7], 0
    %16 = vsyncpa [#allocation10], 0
    %17 = vsyncpa [#allocation8], 0
    %18 = vsyncpa [#allocation13], 0
    // Predicated region
    $region2: #{tpu_custom_call.1} parent=1 // pred_check
      _
    $region3: #{tpu_custom_call.1} parent=1 // pred_check_branch
      %20 = sbr.rel (0) target = $region5
    $region4: #{tpu_custom_call.1} parent=1 // pred_region
      %s22 = ssub.s32 256, 256
      %23 = vsyncadd [#allocation7], %s22
      %s24 = sshll.u32 [#allocation6], 4
      %s25 = int_to_ptr.vmem [resolvable:$true] %s24
      %30 = dma.hbm_to_vmem [thread:$0]  %s0, 256, %s25, [#allocation7], 128, 128, 8
    $region5: #{tpu_custom_call.1} parent=1 // pred_fallthru
      _
    // Predicated region
    $region6: #{tpu_custom_call.1} parent=1 // pred_check
      _
    $region7: #{tpu_custom_call.1} parent=1 // pred_check_branch
      %32 = sbr.rel (0) target = $region9
    $region8: #{tpu_custom_call.1} parent=1 // pred_region
      %s34 = ssub.s32 512, 512
      %35 = vsyncadd [#allocation10], %s34
      %s36 = sshll.u32 [#allocation9], 4
      %s37 = int_to_ptr.vmem [resolvable:$true] %s36
      %42 = dma.hbm_to_vmem [thread:$0]  %s1, 512, %s37, [#allocation10], 128, 128, 8
    $region9: #{tpu_custom_call.1} parent=1 // pred_fallthru
      _
    // Predicated region
    $region10: #{tpu_custom_call.1} parent=1 // pred_check
      _
    $region11: #{tpu_custom_call.1} parent=1 // pred_check_branch
      %44 = sbr.rel (0) target = $region13
    $region12: #{tpu_custom_call.1} parent=1 // pred_region
      _
    $region13: #{tpu_custom_call.1} parent=1 // pred_fallthru
      _
    // Predicated region
    $region14: #{tpu_custom_call.1} parent=1 // pred_check
      _
    $region15: #{tpu_custom_call.1} parent=1 // pred_check_branch
      %46 = sbr.rel (0) target = $region17
    $region16: #{tpu_custom_call.1} parent=1 // pred_region
      _
    $region17: #{tpu_custom_call.1} parent=1 // pred_fallthru
      _
    // Predicated region
    $region18: #{tpu_custom_call.1} parent=1 // pred_check
      _
    $region19: #{tpu_custom_call.1} parent=1 // pred_check_branch
      %48 = sbr.rel (0) target = $region21
    $region20: #{tpu_custom_call.1} parent=1 // pred_region
      %49 = dma.done [#allocation7], 256
    $region21: #{tpu_custom_call.1} parent=1 // pred_fallthru
      _
    // Predicated region
    $region22: #{tpu_custom_call.1} parent=1 // pred_check
      _
    $region23: #{tpu_custom_call.1} parent=1 // pred_check_branch
      %51 = sbr.rel (0) target = $region25
    $region24: #{tpu_custom_call.1} parent=1 // pred_region
      %52 = dma.done [#allocation10], 512
    $region25: #{tpu_custom_call.1} parent=1 // pred_fallthru
      _
    %p53 = scmp.eq.s32.totalorder 0, 0
    // Predicated region
    $region26: #{tpu_custom_call.1} parent=1 // pred_check
      %p54 = pneg %p53
    $region27: #{tpu_custom_call.1} parent=1 // pred_check_branch
      %56 = sbr.rel (%p54) target = $region29
    $region28: #{tpu_custom_call.1} parent=1 // pred_region
      %vm57 = vcmask 254976
      %58 = vst.msk [vmem:[#allocation2] sm:$0x3] %vm57, 0.0
      %59 = vst.msk [vmem:[#allocation3] sm:$0x3] %vm57, 0.0
      %vm60 = vcmask 1024
      %61 = vst.msk [vmem:[#allocation4] sm:$0x3] %vm60, 1.0
    $region29: #{tpu_custom_call.1} parent=1 // pred_fallthru
      _
    %v62 = vld [vmem:[#allocation9] sm:$0xff]
    %v63 = vld [vmem:[#allocation9 + $0x8] sm:$0xff]
    %v64 = vld [vmem:[#allocation9 + $0x10] sm:$0xff]
    %v65 = vld [vmem:[#allocation9 + $0x18] sm:$0xff]
    %v66 = vld [vmem:[%s2] sm:$0x1]
    %v67 = vld [vmem:[#allocation5] sm:$0x1]
    %v68 = vld [vmem:[#allocation6] sm:$0xff]
    %v69 = vld [vmem:[#allocation6 + $0x8] sm:$0xff]
    %v70 = vld [vmem:[#allocation2] sm:$0x3]
    %v71 = vld [vmem:[#allocation3] sm:$0x3]
    %v72 = vld [vmem:[#allocation4] sm:$0x3]
    %vm73 = vcmask 261120
    %v75 = vsel %vm73, %v70, 0
    %77 = vmatprep.subr.mxu0 0.0
    %78 = vmatpush1.msra.mxu0 0.0
    %79 = vmatprep.subr.mxu0 0.0
    %80 = vmatpush1.msra.mxu0 0.0
    %81 = vmatprep.subr.mxu0 0.0
    %82 = vmatpush1.msra.mxu0 0.0
    %83 = vmatprep.subr.mxu0 0.0
    %84 = vmatpush1.msra.mxu0 0.0
    %85 = vmatprep.subr.mxu0 0.0
    %86 = vmatpush1.msra.mxu0 0.0
    %87 = vmatprep.subr.mxu0 0.0
    %88 = vmatpush1.msra.mxu0 0.0
    %89 = vmatprep.subr.mxu0 0.0
    %90 = vmatpush1.msra.mxu0 0.0
    %91 = vmatprep.subr.mxu0 0.0
    %92 = vmatpush1.msra.mxu0 0.0
    %93 = vmatprep.subr.mxu0 0.0
    %94 = vmatpush1.msra.mxu0 0.0
    %95 = vmatprep.subr.mxu0 0.0
    %96 = vmatpush1.msra.mxu0 0.0
    %97 = vmatprep.subr.mxu0 0.0
    %98 = vmatpush1.msra.mxu0 0.0
    %99 = vmatprep.subr.mxu0 0.0
    %100 = vmatpush1.msra.mxu0 0.0
    %101 = vmatprep.subr.mxu0 0.0
    %102 = vmatpush1.msra.mxu0 %v65
    %103 = vmatprep.subr.mxu0 0.0
    %104 = vmatpush1.msra.mxu0 %v64
    %105 = vmatprep.subr.mxu0 0.0
    %106 = vmatpush1.msra.mxu0 %v63
    %107 = vmatprep.subr.mxu0 0.0
    %108 = vmatpush1.msra.mxu0 %v62
    %109 = vmatprep.subr.mxu0 0.0
    %110 = vmatpush2.msra.mxu0 0.0
    %111 = vmatprep.subr.mxu0 0.0
    %112 = vmatpush2.msra.mxu0 0.0
    %113 = vmatprep.subr.mxu0 0.0
    %114 = vmatpush2.msra.mxu0 0.0
    %115 = vmatprep.subr.mxu0 0.0
    %116 = vmatpush2.msra.mxu0 0.0
    %117 = vmatprep.subr.mxu0 0.0
    %118 = vmatpush2.msra.mxu0 0.0
    %119 = vmatprep.subr.mxu0 0.0
    %120 = vmatpush2.msra.mxu0 0.0
    %121 = vmatprep.subr.mxu0 0.0
    %122 = vmatpush2.msra.mxu0 0.0
    %123 = vmatprep.subr.mxu0 0.0
    %124 = vmatpush2.msra.mxu0 0.0
    %125 = vmatprep.subr.mxu0 0.0
    %126 = vmatpush2.msra.mxu0 0.0
    %127 = vmatprep.subr.mxu0 0.0
    %128 = vmatpush2.msra.mxu0 0.0
    %129 = vmatprep.subr.mxu0 0.0
    %130 = vmatpush2.msra.mxu0 0.0
    %131 = vmatprep.subr.mxu0 0.0
    %132 = vmatpush2.msra.mxu0 0.0
    %133 = vmatprep.subr.mxu0 0.0
    %134 = vmatpush2.msra.mxu0 0.0
    %135 = vmatprep.subr.mxu0 0.0
    %136 = vmatpush2.msra.mxu0 0.0
    %137 = vmatprep.subr.mxu0 0.0
    %138 = vmatpush2.msra.mxu0 0.0
    %139 = vmatprep.subr.mxu0 0.0
    %140 = vmatpush2.msra.mxu0 0.0
    %141 = vmatprep.mubr.f32.mxu0 0.0
    %142 = vmatmul.mubr.f32.gmra.mxu0 %v75
    %v143 = vpop.f32.mrf.mxu0
    %v144 = vadd.f32 0.0, %v143
    %v145 = vpop.f32.mrf.mxu0
    %146 = vdwg.mxu0
    %v148 = vrot.slane %v144, 1
    %v151 = vadd.f32 %v68, %v144
    %v152 = vadd.f32 %v69, %v148
    %v153 = vxor.u32 %v151, 2147483648
    %v154 = vxor.u32 %v152, 2147483648
    %v155 = vmul.f32 %v153, 1.442695
    %v156 = vpow.pop %v155
    %v157 = vmul.f32 %v154, 1.442695
    %v158 = vpow.pop %v157
    %v159 = vadd.f32 %v156, 1.0
    %v160 = vadd.f32 %v158, 1.0
    %v161 = vrcp.pop %v159
    %v162 = vmul.f32 1.0, %v161
    %v163 = vrcp.pop %v160
    %v164 = vmul.f32 1.0, %v163
    %v165 = vtanh.pop %v151
    %v166 = vtanh.pop %v152
    %v168 = vrot.slane %v71, 1
    %169 = vrot.lane.b32.xlu0 %v71, 32
    %v170 = vpop.permute.xlu0 %169
    %171 = vrot.lane.b32.xlu0 %v168, 32
    %v172 = vpop.permute.xlu0 %171
    %v175 = vmul.f32 %v162, %v170
    %v176 = vmul.f32 %v164, %v172
    %179 = vrot.lane.b32.xlu0 %v165, 64
    %v180 = vpop.permute.xlu0 %179
    %181 = vrot.lane.b32.xlu0 %v166, 64
    %v182 = vpop.permute.xlu0 %181
    %v185 = vmul.f32 %v162, %v180
    %v186 = vmul.f32 %v164, %v182
    %189 = vrot.lane.b32.xlu0 %v185, 32
    %v190 = vpop.permute.xlu0 %189
    %191 = vrot.lane.b32.xlu0 %v186, 32
    %v192 = vpop.permute.xlu0 %191
    %v195 = vadd.f32 %v175, %v190
    %v196 = vadd.f32 %v176, %v192
    %v197 = vround.ne.pseudo %v72
    %v198 = vtanh.pop %v195
    %v199 = vtanh.pop %v196
    %202 = vrot.lane.b32.xlu0 %v198, 64
    %v203 = vpop.permute.xlu0 %202
    %204 = vrot.lane.b32.xlu0 %v199, 64
    %v205 = vpop.permute.xlu0 %204
    %v208 = vmul.f32 %v162, %v203
    %v209 = vmul.f32 %v164, %v205
    %211 = vset.pattern.permute.xlu0 0
    %212 = vperm.xlu0 %211, %v197
    %v213 = vpop.permute.xlu0 %212
    %v217 = vrot.slane %v209, 7
    %vm218 = vcmask 1041409
    %v219 = vsel %vm218, %v217, %v208
    %220 = vrot.lane.b32.xlu0 %v219, 32
    %v221 = vpop.permute.xlu0 %220
    %v223 = vmul.f32 %v213, %v221
    %v224 = vsub.f32 1.0, %v197
    %226 = vset.pattern.permute.xlu0 0
    %227 = vperm.xlu0 %226, %v224
    %v228 = vpop.permute.xlu0 %227
    %v230 = vmul.f32 %v228, %v70
    %v231 = vadd.f32 %v223, %v230
    %v233 = vlaneseq
    %v234 = vshrl.u32 %v233, 7
    %v235 = vsub.s32 0, %v234
    %v236 = vrot.slane %v66, %v235
    %v238 = vmul.f32 %v231, %v236
    %vm239 = vcmask 254976
    %v240 = vsel %vm239, %v238, 0.0
    %241 = vadd.xlane.f32.xlu0 %v240
    %v242 = vpop.xlane.xlu0 %241
    %v244 = vlaneseq
    %v245 = vshrl.u32 %v244, 7
    %v246 = vsub.s32 0, %v245
    %v247 = vrot.slane %v67, %v246
    %v249 = vadd.f32 %v242, %v247
    %v250 = vxor.u32 %v249, 2147483648
    %v251 = vmul.f32 %v250, 1.442695
    %v252 = vpow.pop %v251
    %v253 = vadd.f32 %v252, 1.0
    %v254 = vrcp.pop %v253
    %v255 = vmul.f32 1.0, %v254
    %v256 = vmul.f32 %v197, %v255
    %v257 = vsub.f32 1.0, %v72
    %v258 = vmin.f32 %v255, %v257
    %v259 = vadd.f32 %v72, %v258
    %v260 = vmul.f32 %v224, %v259
    %v261 = vadd.f32 %v256, %v260
    %v263 = vsel %vm73, %v231, 0
    %265 = vmatprep.subr.mxu0 0.0
    %266 = vmatpush1.msra.mxu0 0.0
    %267 = vmatprep.subr.mxu0 0.0
    %268 = vmatpush1.msra.mxu0 0.0
    %269 = vmatprep.subr.mxu0 0.0
    %270 = vmatpush1.msra.mxu0 0.0
    %271 = vmatprep.subr.mxu0 0.0
    %272 = vmatpush1.msra.mxu0 0.0
    %273 = vmatprep.subr.mxu0 0.0
    %274 = vmatpush1.msra.mxu0 0.0
    %275 = vmatprep.subr.mxu0 0.0
    %276 = vmatpush1.msra.mxu0 0.0
    %277 = vmatprep.subr.mxu0 0.0
    %278 = vmatpush1.msra.mxu0 0.0
    %279 = vmatprep.subr.mxu0 0.0
    %280 = vmatpush1.msra.mxu0 0.0
    %281 = vmatprep.subr.mxu0 0.0
    %282 = vmatpush1.msra.mxu0 0.0
    %283 = vmatprep.subr.mxu0 0.0
    %284 = vmatpush1.msra.mxu0 0.0
    %285 = vmatprep.subr.mxu0 0.0
    %286 = vmatpush1.msra.mxu0 0.0
    %287 = vmatprep.subr.mxu0 0.0
    %288 = vmatpush1.msra.mxu0 0.0
    %289 = vmatprep.subr.mxu0 0.0
    %290 = vmatpush1.msra.mxu0 %v65
    %291 = vmatprep.subr.mxu0 0.0
    %292 = vmatpush1.msra.mxu0 %v64
    %293 = vmatprep.subr.mxu0 0.0
    %294 = vmatpush1.msra.mxu0 %v63
    %295 = vmatprep.subr.mxu0 0.0
    %296 = vmatpush1.msra.mxu0 %v62
    %297 = vmatprep.subr.mxu0 0.0
    %298 = vmatpush2.msra.mxu0 0.0
    %299 = vmatprep.subr.mxu0 0.0
    %300 = vmatpush2.msra.mxu0 0.0
    %301 = vmatprep.subr.mxu0 0.0
    %302 = vmatpush2.msra.mxu0 0.0
    %303 = vmatprep.subr.mxu0 0.0
    %304 = vmatpush2.msra.mxu0 0.0
    %305 = vmatprep.subr.mxu0 0.0
    %306 = vmatpush2.msra.mxu0 0.0
    %307 = vmatprep.subr.mxu0 0.0
    %308 = vmatpush2.msra.mxu0 0.0
    %309 = vmatprep.subr.mxu0 0.0
    %310 = vmatpush2.msra.mxu0 0.0
    %311 = vmatprep.subr.mxu0 0.0
    %312 = vmatpush2.msra.mxu0 0.0
    %313 = vmatprep.subr.mxu0 0.0
    %314 = vmatpush2.msra.mxu0 0.0
    %315 = vmatprep.subr.mxu0 0.0
    %316 = vmatpush2.msra.mxu0 0.0
    %317 = vmatprep.subr.mxu0 0.0
    %318 = vmatpush2.msra.mxu0 0.0
    %319 = vmatprep.subr.mxu0 0.0
    %320 = vmatpush2.msra.mxu0 0.0
    %321 = vmatprep.subr.mxu0 0.0
    %322 = vmatpush2.msra.mxu0 0.0
    %323 = vmatprep.subr.mxu0 0.0
    %324 = vmatpush2.msra.mxu0 0.0
    %325 = vmatprep.subr.mxu0 0.0
    %326 = vmatpush2.msra.mxu0 0.0
    %327 = vmatprep.subr.mxu0 0.0
    %328 = vmatpush2.msra.mxu0 0.0
    %329 = vmatprep.mubr.f32.mxu0 0.0
    %330 = vmatmul.mubr.f32.gmra.mxu0 %v263
    %v331 = vpop.f32.mrf.mxu0
    %v332 = vadd.f32 0.0, %v331
    %v333 = vpop.f32.mrf.mxu0
    %334 = vdwg.mxu0
    %v336 = vrot.slane %v332, 7
    %v339 = vadd.f32 %v68, %v336
    %v340 = vadd.f32 %v69, %v332
    %v341 = vxor.u32 %v339, 2147483648
    %v342 = vxor.u32 %v340, 2147483648
    %v343 = vmul.f32 %v341, 1.442695
    %v344 = vpow.pop %v343
    %v345 = vmul.f32 %v342, 1.442695
    %v346 = vpow.pop %v345
    %v347 = vadd.f32 %v344, 1.0
    %v348 = vadd.f32 %v346, 1.0
    %v349 = vrcp.pop %v347
    %v350 = vmul.f32 1.0, %v349
    %v351 = vrcp.pop %v348
    %v352 = vmul.f32 1.0, %v351
    %v353 = vtanh.pop %v339
    %v354 = vtanh.pop %v340
    %v357 = vrot.slane %v195, 7
    %v358 = vrot.slane %v196, 7
    %v361 = vmul.f32 %v350, %v357
    %v362 = vmul.f32 %v352, %v358
    %365 = vrot.lane.b32.xlu0 %v353, 64
    %v366 = vpop.permute.xlu0 %365
    %367 = vrot.lane.b32.xlu0 %v354, 64
    %v368 = vpop.permute.xlu0 %367
    %v371 = vmul.f32 %v350, %v366
    %v372 = vmul.f32 %v352, %v368
    %375 = vrot.lane.b32.xlu0 %v371, 32
    %v376 = vpop.permute.xlu0 %375
    %377 = vrot.lane.b32.xlu0 %v372, 32
    %v378 = vpop.permute.xlu0 %377
    %v381 = vadd.f32 %v361, %v376
    %v382 = vadd.f32 %v362, %v378
    %v383 = vround.ne.pseudo %v261
    %v384 = vtanh.pop %v381
    %v385 = vtanh.pop %v382
    %388 = vrot.lane.b32.xlu0 %v384, 64
    %v389 = vpop.permute.xlu0 %388
    %390 = vrot.lane.b32.xlu0 %v385, 64
    %v391 = vpop.permute.xlu0 %390
    %v394 = vmul.f32 %v350, %v389
    %v395 = vmul.f32 %v352, %v391
    %397 = vset.pattern.permute.xlu0 0
    %398 = vperm.xlu0 %397, %v383
    %v399 = vpop.permute.xlu0 %398
    %v403 = vrot.slane %v394, 1
    %v404 = vsel %vm218, %v395, %v403
    %405 = vrot.lane.b32.xlu0 %v404, 32
    %v406 = vpop.permute.xlu0 %405
    %v408 = vmul.f32 %v399, %v406
    %v409 = vsub.f32 1.0, %v383
    %411 = vset.pattern.permute.xlu0 0
    %412 = vperm.xlu0 %411, %v409
    %v413 = vpop.permute.xlu0 %412
    %v415 = vmul.f32 %v413, %v231
    %v416 = vadd.f32 %v408, %v415
    %v417 = vmul.f32 %v416, %v236
    %v418 = vsel %vm239, %v417, 0.0
    %419 = vadd.xlane.f32.xlu0 %v418
    %v420 = vpop.xlane.xlu0 %419
    %v421 = vadd.f32 %v420, %v247
    %v422 = vxor.u32 %v421, 2147483648
    %v423 = vmul.f32 %v422, 1.442695
    %v424 = vpow.pop %v423
    %v425 = vadd.f32 %v424, 1.0
    %v426 = vrcp.pop %v425
    %v427 = vmul.f32 1.0, %v426
    %v428 = vmul.f32 %v383, %v427
    %v429 = vsub.f32 1.0, %v261
    %v430 = vmin.f32 %v427, %v429
    %v431 = vadd.f32 %v261, %v430
    %v432 = vmul.f32 %v409, %v431
    %v433 = vadd.f32 %v428, %v432
    %v435 = vsel %vm73, %v416, 0
    %437 = vmatprep.subr.mxu0 0.0
    %438 = vmatpush1.msra.mxu0 0.0
    %439 = vmatprep.subr.mxu0 0.0
    %440 = vmatpush1.msra.mxu0 0.0
    %441 = vmatprep.subr.mxu0 0.0
    %442 = vmatpush1.msra.mxu0 0.0
    %443 = vmatprep.subr.mxu0 0.0
    %444 = vmatpush1.msra.mxu0 0.0
    %445 = vmatprep.subr.mxu0 0.0
    %446 = vmatpush1.msra.mxu0 0.0
    %447 = vmatprep.subr.mxu0 0.0
    %448 = vmatpush1.msra.mxu0 0.0
    %449 = vmatprep.subr.mxu0 0.0
    %450 = vmatpush1.msra.mxu0 0.0
    %451 = vmatprep.subr.mxu0 0.0
    %452 = vmatpush1.msra.mxu0 0.0
    %453 = vmatprep.subr.mxu0 0.0
    %454 = vmatpush1.msra.mxu0 0.0
    %455 = vmatprep.subr.mxu0 0.0
    %456 = vmatpush1.msra.mxu0 0.0
    %457 = vmatprep.subr.mxu0 0.0
    %458 = vmatpush1.msra.mxu0 0.0
    %459 = vmatprep.subr.mxu0 0.0
    %460 = vmatpush1.msra.mxu0 0.0
    %461 = vmatprep.subr.mxu0 0.0
    %462 = vmatpush1.msra.mxu0 %v65
    %463 = vmatprep.subr.mxu0 0.0
    %464 = vmatpush1.msra.mxu0 %v64
    %465 = vmatprep.subr.mxu0 0.0
    %466 = vmatpush1.msra.mxu0 %v63
    %467 = vmatprep.subr.mxu0 0.0
    %468 = vmatpush1.msra.mxu0 %v62
    %469 = vmatprep.subr.mxu0 0.0
    %470 = vmatpush2.msra.mxu0 0.0
    %471 = vmatprep.subr.mxu0 0.0
    %472 = vmatpush2.msra.mxu0 0.0
    %473 = vmatprep.subr.mxu0 0.0
    %474 = vmatpush2.msra.mxu0 0.0
    %475 = vmatprep.subr.mxu0 0.0
    %476 = vmatpush2.msra.mxu0 0.0
    %477 = vmatprep.subr.mxu0 0.0
    %478 = vmatpush2.msra.mxu0 0.0
    %479 = vmatprep.subr.mxu0 0.0
    %480 = vmatpush2.msra.mxu0 0.0
    %481 = vmatprep.subr.mxu0 0.0
    %482 = vmatpush2.msra.mxu0 0.0
    %483 = vmatprep.subr.mxu0 0.0
    %484 = vmatpush2.msra.mxu0 0.0
    %485 = vmatprep.subr.mxu0 0.0
    %486 = vmatpush2.msra.mxu0 0.0
    %487 = vmatprep.subr.mxu0 0.0
    %488 = vmatpush2.msra.mxu0 0.0
    %489 = vmatprep.subr.mxu0 0.0
    %490 = vmatpush2.msra.mxu0 0.0
    %491 = vmatprep.subr.mxu0 0.0
    %492 = vmatpush2.msra.mxu0 0.0
    %493 = vmatprep.subr.mxu0 0.0
    %494 = vmatpush2.msra.mxu0 0.0
    %495 = vmatprep.subr.mxu0 0.0
    %496 = vmatpush2.msra.mxu0 0.0
    %497 = vmatprep.subr.mxu0 0.0
    %498 = vmatpush2.msra.mxu0 0.0
    %499 = vmatprep.subr.mxu0 0.0
    %500 = vmatpush2.msra.mxu0 0.0
    %501 = vmatprep.mubr.f32.mxu0 0.0
    %502 = vmatmul.mubr.f32.gmra.mxu0 %v435
    %v503 = vpop.f32.mrf.mxu0
    %v504 = vadd.f32 0.0, %v503
    %v505 = vpop.f32.mrf.mxu0
    %506 = vdwg.mxu0
    %v508 = vrot.slane %v504, 6
    %v509 = vrot.slane %v504, 7
    %v512 = vadd.f32 %v68, %v508
    %v513 = vadd.f32 %v69, %v509
    %v514 = vxor.u32 %v512, 2147483648
    %v515 = vxor.u32 %v513, 2147483648
    %v516 = vmul.f32 %v514, 1.442695
    %v517 = vpow.pop %v516
    %v518 = vmul.f32 %v515, 1.442695
    %v519 = vpow.pop %v518
    %v520 = vadd.f32 %v517, 1.0
    %v521 = vadd.f32 %v519, 1.0
    %v522 = vrcp.pop %v520
    %v523 = vmul.f32 1.0, %v522
    %v524 = vrcp.pop %v521
    %v525 = vmul.f32 1.0, %v524
    %v526 = vtanh.pop %v512
    %v527 = vtanh.pop %v513
    %v530 = vrot.slane %v381, 7
    %v531 = vrot.slane %v382, 7
    %v534 = vmul.f32 %v523, %v530
    %v535 = vmul.f32 %v525, %v531
    %538 = vrot.lane.b32.xlu0 %v526, 64
    %v539 = vpop.permute.xlu0 %538
    %540 = vrot.lane.b32.xlu0 %v527, 64
    %v541 = vpop.permute.xlu0 %540
    %v544 = vmul.f32 %v523, %v539
    %v545 = vmul.f32 %v525, %v541
    %548 = vrot.lane.b32.xlu0 %v544, 32
    %v549 = vpop.permute.xlu0 %548
    %550 = vrot.lane.b32.xlu0 %v545, 32
    %v551 = vpop.permute.xlu0 %550
    %v554 = vadd.f32 %v534, %v549
    %v555 = vadd.f32 %v535, %v551
    %v556 = vround.ne.pseudo %v433
    %v557 = vtanh.pop %v554
    %v558 = vtanh.pop %v555
    %561 = vrot.lane.b32.xlu0 %v557, 64
    %v562 = vpop.permute.xlu0 %561
    %563 = vrot.lane.b32.xlu0 %v558, 64
    %v564 = vpop.permute.xlu0 %563
    %v567 = vmul.f32 %v523, %v562
    %v568 = vmul.f32 %v525, %v564
    %570 = vset.pattern.permute.xlu0 0
    %571 = vperm.xlu0 %570, %v556
    %v572 = vpop.permute.xlu0 %571
    %v576 = vrot.slane %v567, 2
    %v577 = vrot.slane %v568, 1
    %v578 = vsel %vm218, %v577, %v576
    %579 = vrot.lane.b32.xlu0 %v578, 32
    %v580 = vpop.permute.xlu0 %579
    %v582 = vmul.f32 %v572, %v580
    %v583 = vsub.f32 1.0, %v556
    %585 = vset.pattern.permute.xlu0 0
    %586 = vperm.xlu0 %585, %v583
    %v587 = vpop.permute.xlu0 %586
    %v589 = vmul.f32 %v587, %v416
    %v590 = vadd.f32 %v582, %v589
    %v591 = vmul.f32 %v590, %v236
    %v592 = vsel %vm239, %v591, 0.0
    %593 = vadd.xlane.f32.xlu0 %v592
    %v594 = vpop.xlane.xlu0 %593
    %v595 = vadd.f32 %v594, %v247
    %v596 = vxor.u32 %v595, 2147483648
    %v597 = vmul.f32 %v596, 1.442695
    %v598 = vpow.pop %v597
    %v599 = vadd.f32 %v598, 1.0
    %v600 = vrcp.pop %v599
    %v601 = vmul.f32 1.0, %v600
    %v602 = vmul.f32 %v556, %v601
    %v603 = vsub.f32 1.0, %v433
    %v604 = vmin.f32 %v601, %v603
    %v605 = vadd.f32 %v433, %v604
    %v606 = vmul.f32 %v583, %v605
    %v607 = vadd.f32 %v602, %v606
    %v609 = vsel %vm73, %v590, 0
    %611 = vmatprep.subr.mxu0 0.0
    %612 = vmatpush1.msra.mxu0 0.0
    %613 = vmatprep.subr.mxu0 0.0
    %614 = vmatpush1.msra.mxu0 0.0
    %615 = vmatprep.subr.mxu0 0.0
    %616 = vmatpush1.msra.mxu0 0.0
    %617 = vmatprep.subr.mxu0 0.0
    %618 = vmatpush1.msra.mxu0 0.0
    %619 = vmatprep.subr.mxu0 0.0
    %620 = vmatpush1.msra.mxu0 0.0
    %621 = vmatprep.subr.mxu0 0.0
    %622 = vmatpush1.msra.mxu0 0.0
    %623 = vmatprep.subr.mxu0 0.0
    %624 = vmatpush1.msra.mxu0 0.0
    %625 = vmatprep.subr.mxu0 0.0
    %626 = vmatpush1.msra.mxu0 0.0
    %627 = vmatprep.subr.mxu0 0.0
    %628 = vmatpush1.msra.mxu0 0.0
    %629 = vmatprep.subr.mxu0 0.0
    %630 = vmatpush1.msra.mxu0 0.0
    %631 = vmatprep.subr.mxu0 0.0
    %632 = vmatpush1.msra.mxu0 0.0
    %633 = vmatprep.subr.mxu0 0.0
    %634 = vmatpush1.msra.mxu0 0.0
    %635 = vmatprep.subr.mxu0 0.0
    %636 = vmatpush1.msra.mxu0 %v65
    %637 = vmatprep.subr.mxu0 0.0
    %638 = vmatpush1.msra.mxu0 %v64
    %639 = vmatprep.subr.mxu0 0.0
    %640 = vmatpush1.msra.mxu0 %v63
    %641 = vmatprep.subr.mxu0 0.0
    %642 = vmatpush1.msra.mxu0 %v62
    %643 = vmatprep.subr.mxu0 0.0
    %644 = vmatpush2.msra.mxu0 0.0
    %645 = vmatprep.subr.mxu0 0.0
    %646 = vmatpush2.msra.mxu0 0.0
    %647 = vmatprep.subr.mxu0 0.0
    %648 = vmatpush2.msra.mxu0 0.0
    %649 = vmatprep.subr.mxu0 0.0
    %650 = vmatpush2.msra.mxu0 0.0
    %651 = vmatprep.subr.mxu0 0.0
    %652 = vmatpush2.msra.mxu0 0.0
    %653 = vmatprep.subr.mxu0 0.0
    %654 = vmatpush2.msra.mxu0 0.0
    %655 = vmatprep.subr.mxu0 0.0
    %656 = vmatpush2.msra.mxu0 0.0
    %657 = vmatprep.subr.mxu0 0.0
    %658 = vmatpush2.msra.mxu0 0.0
    %659 = vmatprep.subr.mxu0 0.0
    %660 = vmatpush2.msra.mxu0 0.0
    %661 = vmatprep.subr.mxu0 0.0
    %662 = vmatpush2.msra.mxu0 0.0
    %663 = vmatprep.subr.mxu0 0.0
    %664 = vmatpush2.msra.mxu0 0.0
    %665 = vmatprep.subr.mxu0 0.0
    %666 = vmatpush2.msra.mxu0 0.0
    %667 = vmatprep.subr.mxu0 0.0
    %668 = vmatpush2.msra.mxu0 0.0
    %669 = vmatprep.subr.mxu0 0.0
    %670 = vmatpush2.msra.mxu0 0.0
    %671 = vmatprep.subr.mxu0 0.0
    %672 = vmatpush2.msra.mxu0 0.0
    %673 = vmatprep.subr.mxu0 0.0
    %674 = vmatpush2.msra.mxu0 0.0
    %675 = vmatprep.mubr.f32.mxu0 0.0
    %676 = vmatmul.mubr.f32.gmra.mxu0 %v609
    %v677 = vpop.f32.mrf.mxu0
    %v678 = vadd.f32 0.0, %v677
    %v679 = vpop.f32.mrf.mxu0
    %680 = vdwg.mxu0
    %v682 = vrot.slane %v678, 5
    %v683 = vrot.slane %v678, 6
    %v686 = vadd.f32 %v68, %v682
    %v687 = vadd.f32 %v69, %v683
    %v688 = vxor.u32 %v686, 2147483648
    %v689 = vxor.u32 %v687, 2147483648
    %v690 = vmul.f32 %v688, 1.442695
    %v691 = vpow.pop %v690
    %v692 = vmul.f32 %v689, 1.442695
    %v693 = vpow.pop %v692
    %v694 = vadd.f32 %v691, 1.0
    %v695 = vadd.f32 %v693, 1.0
    %v696 = vrcp.pop %v694
    %v697 = vmul.f32 1.0, %v696
    %v698 = vrcp.pop %v695
    %v699 = vmul.f32 1.0, %v698
    %v700 = vtanh.pop %v686
    %v701 = vtanh.pop %v687
    %v704 = vrot.slane %v554, 7
    %v705 = vrot.slane %v555, 7
    %v708 = vmul.f32 %v697, %v704
    %v709 = vmul.f32 %v699, %v705
    %712 = vrot.lane.b32.xlu0 %v700, 64
    %v713 = vpop.permute.xlu0 %712
    %714 = vrot.lane.b32.xlu0 %v701, 64
    %v715 = vpop.permute.xlu0 %714
    %v718 = vmul.f32 %v697, %v713
    %v719 = vmul.f32 %v699, %v715
    %722 = vrot.lane.b32.xlu0 %v718, 32
    %v723 = vpop.permute.xlu0 %722
    %724 = vrot.lane.b32.xlu0 %v719, 32
    %v725 = vpop.permute.xlu0 %724
    %v728 = vadd.f32 %v708, %v723
    %v729 = vadd.f32 %v709, %v725
    %v730 = vround.ne.pseudo %v607
    %v731 = vtanh.pop %v728
    %v732 = vtanh.pop %v729
    %735 = vrot.lane.b32.xlu0 %v731, 64
    %v736 = vpop.permute.xlu0 %735
    %737 = vrot.lane.b32.xlu0 %v732, 64
    %v738 = vpop.permute.xlu0 %737
    %v741 = vmul.f32 %v697, %v736
    %v742 = vmul.f32 %v699, %v738
    %744 = vset.pattern.permute.xlu0 0
    %745 = vperm.xlu0 %744, %v730
    %v746 = vpop.permute.xlu0 %745
    %v750 = vrot.slane %v741, 3
    %v751 = vrot.slane %v742, 2
    %v752 = vsel %vm218, %v751, %v750
    %753 = vrot.lane.b32.xlu0 %v752, 32
    %v754 = vpop.permute.xlu0 %753
    %v756 = vmul.f32 %v746, %v754
    %v757 = vsub.f32 1.0, %v730
    %759 = vset.pattern.permute.xlu0 0
    %760 = vperm.xlu0 %759, %v757
    %v761 = vpop.permute.xlu0 %760
    %v763 = vmul.f32 %v761, %v590
    %v764 = vadd.f32 %v756, %v763
    %v765 = vmul.f32 %v764, %v236
    %v766 = vsel %vm239, %v765, 0.0
    %767 = vadd.xlane.f32.xlu0 %v766
    %v768 = vpop.xlane.xlu0 %767
    %v769 = vadd.f32 %v768, %v247
    %v770 = vxor.u32 %v769, 2147483648
    %v771 = vmul.f32 %v770, 1.442695
    %v772 = vpow.pop %v771
    %v773 = vadd.f32 %v772, 1.0
    %v774 = vrcp.pop %v773
    %v775 = vmul.f32 1.0, %v774
    %v776 = vmul.f32 %v730, %v775
    %v777 = vsub.f32 1.0, %v607
    %v778 = vmin.f32 %v775, %v777
    %v779 = vadd.f32 %v607, %v778
    %v780 = vmul.f32 %v757, %v779
    %v781 = vadd.f32 %v776, %v780
    %v783 = vsel %vm73, %v764, 0
    %785 = vmatprep.subr.mxu0 0.0
    %786 = vmatpush1.msra.mxu0 0.0
    %787 = vmatprep.subr.mxu0 0.0
    %788 = vmatpush1.msra.mxu0 0.0
    %789 = vmatprep.subr.mxu0 0.0
    %790 = vmatpush1.msra.mxu0 0.0
    %791 = vmatprep.subr.mxu0 0.0
    %792 = vmatpush1.msra.mxu0 0.0
    %793 = vmatprep.subr.mxu0 0.0
    %794 = vmatpush1.msra.mxu0 0.0
    %795 = vmatprep.subr.mxu0 0.0
    %796 = vmatpush1.msra.mxu0 0.0
    %797 = vmatprep.subr.mxu0 0.0
    %798 = vmatpush1.msra.mxu0 0.0
    %799 = vmatprep.subr.mxu0 0.0
    %800 = vmatpush1.msra.mxu0 0.0
    %801 = vmatprep.subr.mxu0 0.0
    %802 = vmatpush1.msra.mxu0 0.0
    %803 = vmatprep.subr.mxu0 0.0
    %804 = vmatpush1.msra.mxu0 0.0
    %805 = vmatprep.subr.mxu0 0.0
    %806 = vmatpush1.msra.mxu0 0.0
    %807 = vmatprep.subr.mxu0 0.0
    %808 = vmatpush1.msra.mxu0 0.0
    %809 = vmatprep.subr.mxu0 0.0
    %810 = vmatpush1.msra.mxu0 %v65
    %811 = vmatprep.subr.mxu0 0.0
    %812 = vmatpush1.msra.mxu0 %v64
    %813 = vmatprep.subr.mxu0 0.0
    %814 = vmatpush1.msra.mxu0 %v63
    %815 = vmatprep.subr.mxu0 0.0
    %816 = vmatpush1.msra.mxu0 %v62
    %817 = vmatprep.subr.mxu0 0.0
    %818 = vmatpush2.msra.mxu0 0.0
    %819 = vmatprep.subr.mxu0 0.0
    %820 = vmatpush2.msra.mxu0 0.0
    %821 = vmatprep.subr.mxu0 0.0
    %822 = vmatpush2.msra.mxu0 0.0
    %823 = vmatprep.subr.mxu0 0.0
    %824 = vmatpush2.msra.mxu0 0.0
    %825 = vmatprep.subr.mxu0 0.0
    %826 = vmatpush2.msra.mxu0 0.0
    %827 = vmatprep.subr.mxu0 0.0
    %828 = vmatpush2.msra.mxu0 0.0
    %829 = vmatprep.subr.mxu0 0.0
    %830 = vmatpush2.msra.mxu0 0.0
    %831 = vmatprep.subr.mxu0 0.0
    %832 = vmatpush2.msra.mxu0 0.0
    %833 = vmatprep.subr.mxu0 0.0
    %834 = vmatpush2.msra.mxu0 0.0
    %835 = vmatprep.subr.mxu0 0.0
    %836 = vmatpush2.msra.mxu0 0.0
    %837 = vmatprep.subr.mxu0 0.0
    %838 = vmatpush2.msra.mxu0 0.0
    %839 = vmatprep.subr.mxu0 0.0
    %840 = vmatpush2.msra.mxu0 0.0
    %841 = vmatprep.subr.mxu0 0.0
    %842 = vmatpush2.msra.mxu0 0.0
    %843 = vmatprep.subr.mxu0 0.0
    %844 = vmatpush2.msra.mxu0 0.0
    %845 = vmatprep.subr.mxu0 0.0
    %846 = vmatpush2.msra.mxu0 0.0
    %847 = vmatprep.subr.mxu0 0.0
    %848 = vmatpush2.msra.mxu0 0.0
    %849 = vmatprep.mubr.f32.mxu0 0.0
    %850 = vmatmul.mubr.f32.gmra.mxu0 %v783
    %v851 = vpop.f32.mrf.mxu0
    %v852 = vadd.f32 0.0, %v851
    %v853 = vpop.f32.mrf.mxu0
    %854 = vdwg.mxu0
    %v856 = vrot.slane %v852, 4
    %v857 = vrot.slane %v852, 5
    %v860 = vadd.f32 %v68, %v856
    %v861 = vadd.f32 %v69, %v857
    %v862 = vxor.u32 %v860, 2147483648
    %v863 = vxor.u32 %v861, 2147483648
    %v864 = vmul.f32 %v862, 1.442695
    %v865 = vpow.pop %v864
    %v866 = vmul.f32 %v863, 1.442695
    %v867 = vpow.pop %v866
    %v868 = vadd.f32 %v865, 1.0
    %v869 = vadd.f32 %v867, 1.0
    %v870 = vrcp.pop %v868
    %v871 = vmul.f32 1.0, %v870
    %v872 = vrcp.pop %v869
    %v873 = vmul.f32 1.0, %v872
    %v874 = vtanh.pop %v860
    %v875 = vtanh.pop %v861
    %v878 = vrot.slane %v728, 7
    %v879 = vrot.slane %v729, 7
    %v882 = vmul.f32 %v871, %v878
    %v883 = vmul.f32 %v873, %v879
    %886 = vrot.lane.b32.xlu0 %v874, 64
    %v887 = vpop.permute.xlu0 %886
    %888 = vrot.lane.b32.xlu0 %v875, 64
    %v889 = vpop.permute.xlu0 %888
    %v892 = vmul.f32 %v871, %v887
    %v893 = vmul.f32 %v873, %v889
    %896 = vrot.lane.b32.xlu0 %v892, 32
    %v897 = vpop.permute.xlu0 %896
    %898 = vrot.lane.b32.xlu0 %v893, 32
    %v899 = vpop.permute.xlu0 %898
    %v902 = vadd.f32 %v882, %v897
    %v903 = vadd.f32 %v883, %v899
    %v904 = vround.ne.pseudo %v781
    %v905 = vtanh.pop %v902
    %v906 = vtanh.pop %v903
    %909 = vrot.lane.b32.xlu0 %v905, 64
    %v910 = vpop.permute.xlu0 %909
    %911 = vrot.lane.b32.xlu0 %v906, 64
    %v912 = vpop.permute.xlu0 %911
    %v915 = vmul.f32 %v871, %v910
    %v916 = vmul.f32 %v873, %v912
    %918 = vset.pattern.permute.xlu0 0
    %919 = vperm.xlu0 %918, %v904
    %v920 = vpop.permute.xlu0 %919
    %v924 = vrot.slane %v915, 4
    %v925 = vrot.slane %v916, 3
    %v926 = vsel %vm218, %v925, %v924
    %927 = vrot.lane.b32.xlu0 %v926, 32
    %v928 = vpop.permute.xlu0 %927
    %v930 = vmul.f32 %v920, %v928
    %v931 = vsub.f32 1.0, %v904
    %933 = vset.pattern.permute.xlu0 0
    %934 = vperm.xlu0 %933, %v931
    %v935 = vpop.permute.xlu0 %934
    %v937 = vmul.f32 %v935, %v764
    %v938 = vadd.f32 %v930, %v937
    %v939 = vmul.f32 %v938, %v236
    %v940 = vsel %vm239, %v939, 0.0
    %941 = vadd.xlane.f32.xlu0 %v940
    %v942 = vpop.xlane.xlu0 %941
    %v943 = vadd.f32 %v942, %v247
    %v944 = vxor.u32 %v943, 2147483648
    %v945 = vmul.f32 %v944, 1.442695
    %v946 = vpow.pop %v945
    %v947 = vadd.f32 %v946, 1.0
    %v948 = vrcp.pop %v947
    %v949 = vmul.f32 1.0, %v948
    %v950 = vmul.f32 %v904, %v949
    %v951 = vsub.f32 1.0, %v781
    %v952 = vmin.f32 %v949, %v951
    %v953 = vadd.f32 %v781, %v952
    %v954 = vmul.f32 %v931, %v953
    %v955 = vadd.f32 %v950, %v954
    %v957 = vsel %vm73, %v938, 0
    %959 = vmatprep.subr.mxu0 0.0
    %960 = vmatpush1.msra.mxu0 0.0
    %961 = vmatprep.subr.mxu0 0.0
    %962 = vmatpush1.msra.mxu0 0.0
    %963 = vmatprep.subr.mxu0 0.0
    %964 = vmatpush1.msra.mxu0 0.0
    %965 = vmatprep.subr.mxu0 0.0
    %966 = vmatpush1.msra.mxu0 0.0
    %967 = vmatprep.subr.mxu0 0.0
    %968 = vmatpush1.msra.mxu0 0.0
    %969 = vmatprep.subr.mxu0 0.0
    %970 = vmatpush1.msra.mxu0 0.0
    %971 = vmatprep.subr.mxu0 0.0
    %972 = vmatpush1.msra.mxu0 0.0
    %973 = vmatprep.subr.mxu0 0.0
    %974 = vmatpush1.msra.mxu0 0.0
    %975 = vmatprep.subr.mxu0 0.0
    %976 = vmatpush1.msra.mxu0 0.0
    %977 = vmatprep.subr.mxu0 0.0
    %978 = vmatpush1.msra.mxu0 0.0
    %979 = vmatprep.subr.mxu0 0.0
    %980 = vmatpush1.msra.mxu0 0.0
    %981 = vmatprep.subr.mxu0 0.0
    %982 = vmatpush1.msra.mxu0 0.0
    %983 = vmatprep.subr.mxu0 0.0
    %984 = vmatpush1.msra.mxu0 %v65
    %985 = vmatprep.subr.mxu0 0.0
    %986 = vmatpush1.msra.mxu0 %v64
    %987 = vmatprep.subr.mxu0 0.0
    %988 = vmatpush1.msra.mxu0 %v63
    %989 = vmatprep.subr.mxu0 0.0
    %990 = vmatpush1.msra.mxu0 %v62
    %991 = vmatprep.subr.mxu0 0.0
    %992 = vmatpush2.msra.mxu0 0.0
    %993 = vmatprep.subr.mxu0 0.0
    %994 = vmatpush2.msra.mxu0 0.0
    %995 = vmatprep.subr.mxu0 0.0
    %996 = vmatpush2.msra.mxu0 0.0
    %997 = vmatprep.subr.mxu0 0.0
    %998 = vmatpush2.msra.mxu0 0.0
    %999 = vmatprep.subr.mxu0 0.0
    %1000 = vmatpush2.msra.mxu0 0.0
    %1001 = vmatprep.subr.mxu0 0.0
    %1002 = vmatpush2.msra.mxu0 0.0
    %1003 = vmatprep.subr.mxu0 0.0
    %1004 = vmatpush2.msra.mxu0 0.0
    %1005 = vmatprep.subr.mxu0 0.0
    %1006 = vmatpush2.msra.mxu0 0.0
    %1007 = vmatprep.subr.mxu0 0.0
    %1008 = vmatpush2.msra.mxu0 0.0
    %1009 = vmatprep.subr.mxu0 0.0
    %1010 = vmatpush2.msra.mxu0 0.0
    %1011 = vmatprep.subr.mxu0 0.0
    %1012 = vmatpush2.msra.mxu0 0.0
    %1013 = vmatprep.subr.mxu0 0.0
    %1014 = vmatpush2.msra.mxu0 0.0
    %1015 = vmatprep.subr.mxu0 0.0
    %1016 = vmatpush2.msra.mxu0 0.0
    %1017 = vmatprep.subr.mxu0 0.0
    %1018 = vmatpush2.msra.mxu0 0.0
    %1019 = vmatprep.subr.mxu0 0.0
    %1020 = vmatpush2.msra.mxu0 0.0
    %1021 = vmatprep.subr.mxu0 0.0
    %1022 = vmatpush2.msra.mxu0 0.0
    %1023 = vmatprep.mubr.f32.mxu0 0.0
    %1024 = vmatmul.mubr.f32.gmra.mxu0 %v957
    %v1025 = vpop.f32.mrf.mxu0
    %v1026 = vadd.f32 0.0, %v1025
    %v1027 = vpop.f32.mrf.mxu0
    %1028 = vdwg.mxu0
    %v1030 = vrot.slane %v1026, 3
    %v1031 = vrot.slane %v1026, 4
    %v1034 = vadd.f32 %v68, %v1030
    %v1035 = vadd.f32 %v69, %v1031
    %v1036 = vxor.u32 %v1034, 2147483648
    %v1037 = vxor.u32 %v1035, 2147483648
    %v1038 = vmul.f32 %v1036, 1.442695
    %v1039 = vpow.pop %v1038
    %v1040 = vmul.f32 %v1037, 1.442695
    %v1041 = vpow.pop %v1040
    %v1042 = vadd.f32 %v1039, 1.0
    %v1043 = vadd.f32 %v1041, 1.0
    %v1044 = vrcp.pop %v1042
    %v1045 = vmul.f32 1.0, %v1044
    %v1046 = vrcp.pop %v1043
    %v1047 = vmul.f32 1.0, %v1046
    %v1048 = vtanh.pop %v1034
    %v1049 = vtanh.pop %v1035
    %v1052 = vrot.slane %v902, 7
    %v1053 = vrot.slane %v903, 7
    %v1056 = vmul.f32 %v1045, %v1052
    %v1057 = vmul.f32 %v1047, %v1053
    %1060 = vrot.lane.b32.xlu0 %v1048, 64
    %v1061 = vpop.permute.xlu0 %1060
    %1062 = vrot.lane.b32.xlu0 %v1049, 64
    %v1063 = vpop.permute.xlu0 %1062
    %v1066 = vmul.f32 %v1045, %v1061
    %v1067 = vmul.f32 %v1047, %v1063
    %1070 = vrot.lane.b32.xlu0 %v1066, 32
    %v1071 = vpop.permute.xlu0 %1070
    %1072 = vrot.lane.b32.xlu0 %v1067, 32
    %v1073 = vpop.permute.xlu0 %1072
    %v1076 = vadd.f32 %v1056, %v1071
    %v1077 = vadd.f32 %v1057, %v1073
    %v1078 = vround.ne.pseudo %v955
    %v1079 = vtanh.pop %v1076
    %v1080 = vtanh.pop %v1077
    %1083 = vrot.lane.b32.xlu0 %v1079, 64
    %v1084 = vpop.permute.xlu0 %1083
    %1085 = vrot.lane.b32.xlu0 %v1080, 64
    %v1086 = vpop.permute.xlu0 %1085
    %v1089 = vmul.f32 %v1045, %v1084
    %v1090 = vmul.f32 %v1047, %v1086
    %1092 = vset.pattern.permute.xlu0 0
    %1093 = vperm.xlu0 %1092, %v1078
    %v1094 = vpop.permute.xlu0 %1093
    %v1098 = vrot.slane %v1089, 5
    %v1099 = vrot.slane %v1090, 4
    %v1100 = vsel %vm218, %v1099, %v1098
    %1101 = vrot.lane.b32.xlu0 %v1100, 32
    %v1102 = vpop.permute.xlu0 %1101
    %v1104 = vmul.f32 %v1094, %v1102
    %v1105 = vsub.f32 1.0, %v1078
    %1107 = vset.pattern.permute.xlu0 0
    %1108 = vperm.xlu0 %1107, %v1105
    %v1109 = vpop.permute.xlu0 %1108
    %v1111 = vmul.f32 %v1109, %v938
    %v1112 = vadd.f32 %v1104, %v1111
    %v1113 = vmul.f32 %v1112, %v236
    %v1114 = vsel %vm239, %v1113, 0.0
    %1115 = vadd.xlane.f32.xlu0 %v1114
    %v1116 = vpop.xlane.xlu0 %1115
    %v1117 = vadd.f32 %v1116, %v247
    %v1118 = vxor.u32 %v1117, 2147483648
    %v1119 = vmul.f32 %v1118, 1.442695
    %v1120 = vpow.pop %v1119
    %v1121 = vadd.f32 %v1120, 1.0
    %v1122 = vrcp.pop %v1121
    %v1123 = vmul.f32 1.0, %v1122
    %v1124 = vmul.f32 %v1078, %v1123
    %v1125 = vsub.f32 1.0, %v955
    %v1126 = vmin.f32 %v1123, %v1125
    %v1127 = vadd.f32 %v955, %v1126
    %v1128 = vmul.f32 %v1105, %v1127
    %v1129 = vadd.f32 %v1124, %v1128
    %v1131 = vsel %vm73, %v1112, 0
    %1133 = vmatprep.subr.mxu0 0.0
    %1134 = vmatpush1.msra.mxu0 0.0
    %1135 = vmatprep.subr.mxu0 0.0
    %1136 = vmatpush1.msra.mxu0 0.0
    %1137 = vmatprep.subr.mxu0 0.0
    %1138 = vmatpush1.msra.mxu0 0.0
    %1139 = vmatprep.subr.mxu0 0.0
    %1140 = vmatpush1.msra.mxu0 0.0
    %1141 = vmatprep.subr.mxu0 0.0
    %1142 = vmatpush1.msra.mxu0 0.0
    %1143 = vmatprep.subr.mxu0 0.0
    %1144 = vmatpush1.msra.mxu0 0.0
    %1145 = vmatprep.subr.mxu0 0.0
    %1146 = vmatpush1.msra.mxu0 0.0
    %1147 = vmatprep.subr.mxu0 0.0
    %1148 = vmatpush1.msra.mxu0 0.0
    %1149 = vmatprep.subr.mxu0 0.0
    %1150 = vmatpush1.msra.mxu0 0.0
    %1151 = vmatprep.subr.mxu0 0.0
    %1152 = vmatpush1.msra.mxu0 0.0
    %1153 = vmatprep.subr.mxu0 0.0
    %1154 = vmatpush1.msra.mxu0 0.0
    %1155 = vmatprep.subr.mxu0 0.0
    %1156 = vmatpush1.msra.mxu0 0.0
    %1157 = vmatprep.subr.mxu0 0.0
    %1158 = vmatpush1.msra.mxu0 %v65
    %1159 = vmatprep.subr.mxu0 0.0
    %1160 = vmatpush1.msra.mxu0 %v64
    %1161 = vmatprep.subr.mxu0 0.0
    %1162 = vmatpush1.msra.mxu0 %v63
    %1163 = vmatprep.subr.mxu0 0.0
    %1164 = vmatpush1.msra.mxu0 %v62
    %1165 = vmatprep.subr.mxu0 0.0
    %1166 = vmatpush2.msra.mxu0 0.0
    %1167 = vmatprep.subr.mxu0 0.0
    %1168 = vmatpush2.msra.mxu0 0.0
    %1169 = vmatprep.subr.mxu0 0.0
    %1170 = vmatpush2.msra.mxu0 0.0
    %1171 = vmatprep.subr.mxu0 0.0
    %1172 = vmatpush2.msra.mxu0 0.0
    %1173 = vmatprep.subr.mxu0 0.0
    %1174 = vmatpush2.msra.mxu0 0.0
    %1175 = vmatprep.subr.mxu0 0.0
    %1176 = vmatpush2.msra.mxu0 0.0
    %1177 = vmatprep.subr.mxu0 0.0
    %1178 = vmatpush2.msra.mxu0 0.0
    %1179 = vmatprep.subr.mxu0 0.0
    %1180 = vmatpush2.msra.mxu0 0.0
    %1181 = vmatprep.subr.mxu0 0.0
    %1182 = vmatpush2.msra.mxu0 0.0
    %1183 = vmatprep.subr.mxu0 0.0
    %1184 = vmatpush2.msra.mxu0 0.0
    %1185 = vmatprep.subr.mxu0 0.0
    %1186 = vmatpush2.msra.mxu0 0.0
    %1187 = vmatprep.subr.mxu0 0.0
    %1188 = vmatpush2.msra.mxu0 0.0
    %1189 = vmatprep.subr.mxu0 0.0
    %1190 = vmatpush2.msra.mxu0 0.0
    %1191 = vmatprep.subr.mxu0 0.0
    %1192 = vmatpush2.msra.mxu0 0.0
    %1193 = vmatprep.subr.mxu0 0.0
    %1194 = vmatpush2.msra.mxu0 0.0
    %1195 = vmatprep.subr.mxu0 0.0
    %1196 = vmatpush2.msra.mxu0 0.0
    %1197 = vmatprep.mubr.f32.mxu0 0.0
    %1198 = vmatmul.mubr.f32.gmra.mxu0 %v1131
    %v1199 = vpop.f32.mrf.mxu0
    %v1200 = vadd.f32 0.0, %v1199
    %v1201 = vpop.f32.mrf.mxu0
    %1202 = vdwg.mxu0
    %v1204 = vrot.slane %v1200, 2
    %v1205 = vrot.slane %v1200, 3
    %v1208 = vadd.f32 %v68, %v1204
    %v1209 = vadd.f32 %v69, %v1205
    %v1210 = vxor.u32 %v1208, 2147483648
    %v1211 = vxor.u32 %v1209, 2147483648
    %v1212 = vmul.f32 %v1210, 1.442695
    %v1213 = vpow.pop %v1212
    %v1214 = vmul.f32 %v1211, 1.442695
    %v1215 = vpow.pop %v1214
    %v1216 = vadd.f32 %v1213, 1.0
    %v1217 = vadd.f32 %v1215, 1.0
    %v1218 = vrcp.pop %v1216
    %v1219 = vmul.f32 1.0, %v1218
    %v1220 = vrcp.pop %v1217
    %v1221 = vmul.f32 1.0, %v1220
    %v1222 = vtanh.pop %v1208
    %v1223 = vtanh.pop %v1209
    %v1226 = vrot.slane %v1076, 7
    %v1227 = vrot.slane %v1077, 7
    %v1230 = vmul.f32 %v1219, %v1226
    %v1231 = vmul.f32 %v1221, %v1227
    %1234 = vrot.lane.b32.xlu0 %v1222, 64
    %v1235 = vpop.permute.xlu0 %1234
    %1236 = vrot.lane.b32.xlu0 %v1223, 64
    %v1237 = vpop.permute.xlu0 %1236
    %v1240 = vmul.f32 %v1219, %v1235
    %v1241 = vmul.f32 %v1221, %v1237
    %1244 = vrot.lane.b32.xlu0 %v1240, 32
    %v1245 = vpop.permute.xlu0 %1244
    %1246 = vrot.lane.b32.xlu0 %v1241, 32
    %v1247 = vpop.permute.xlu0 %1246
    %v1250 = vadd.f32 %v1230, %v1245
    %v1251 = vadd.f32 %v1231, %v1247
    %v1252 = vround.ne.pseudo %v1129
    %v1253 = vtanh.pop %v1250
    %v1254 = vtanh.pop %v1251
    %1257 = vrot.lane.b32.xlu0 %v1253, 64
    %v1258 = vpop.permute.xlu0 %1257
    %1259 = vrot.lane.b32.xlu0 %v1254, 64
    %v1260 = vpop.permute.xlu0 %1259
    %v1263 = vmul.f32 %v1219, %v1258
    %v1264 = vmul.f32 %v1221, %v1260
    %1266 = vset.pattern.permute.xlu0 0
    %1267 = vperm.xlu0 %1266, %v1252
    %v1268 = vpop.permute.xlu0 %1267
    %v1272 = vrot.slane %v1263, 6
    %v1273 = vrot.slane %v1264, 5
    %v1274 = vsel %vm218, %v1273, %v1272
    %1275 = vrot.lane.b32.xlu0 %v1274, 32
    %v1276 = vpop.permute.xlu0 %1275
    %v1278 = vmul.f32 %v1268, %v1276
    %v1279 = vsub.f32 1.0, %v1252
    %1281 = vset.pattern.permute.xlu0 0
    %1282 = vperm.xlu0 %1281, %v1279
    %v1283 = vpop.permute.xlu0 %1282
    %v1285 = vmul.f32 %v1283, %v1112
    %v1286 = vadd.f32 %v1278, %v1285
    %v1287 = vmul.f32 %v1286, %v236
    %v1288 = vsel %vm239, %v1287, 0.0
    %1289 = vadd.xlane.f32.xlu0 %v1288
    %v1290 = vpop.xlane.xlu0 %1289
    %v1291 = vadd.f32 %v1290, %v247
    %v1292 = vxor.u32 %v1291, 2147483648
    %v1293 = vmul.f32 %v1292, 1.442695
    %v1294 = vpow.pop %v1293
    %v1295 = vadd.f32 %v1294, 1.0
    %v1296 = vrcp.pop %v1295
    %v1297 = vmul.f32 1.0, %v1296
    %v1298 = vmul.f32 %v1252, %v1297
    %v1299 = vsub.f32 1.0, %v1129
    %v1300 = vmin.f32 %v1297, %v1299
    %v1301 = vadd.f32 %v1129, %v1300
    %v1302 = vmul.f32 %v1279, %v1301
    %v1303 = vadd.f32 %v1298, %v1302
    %v1305 = vsel %vm73, %v1286, 0
    %1307 = vmatprep.subr.mxu0 0.0
    %1308 = vmatpush1.msra.mxu0 0.0
    %1309 = vmatprep.subr.mxu0 0.0
    %1310 = vmatpush1.msra.mxu0 0.0
    %1311 = vmatprep.subr.mxu0 0.0
    %1312 = vmatpush1.msra.mxu0 0.0
    %1313 = vmatprep.subr.mxu0 0.0
    %1314 = vmatpush1.msra.mxu0 0.0
    %1315 = vmatprep.subr.mxu0 0.0
    %1316 = vmatpush1.msra.mxu0 0.0
    %1317 = vmatprep.subr.mxu0 0.0
    %1318 = vmatpush1.msra.mxu0 0.0
    %1319 = vmatprep.subr.mxu0 0.0
    %1320 = vmatpush1.msra.mxu0 0.0
    %1321 = vmatprep.subr.mxu0 0.0
    %1322 = vmatpush1.msra.mxu0 0.0
    %1323 = vmatprep.subr.mxu0 0.0
    %1324 = vmatpush1.msra.mxu0 0.0
    %1325 = vmatprep.subr.mxu0 0.0
    %1326 = vmatpush1.msra.mxu0 0.0
    %1327 = vmatprep.subr.mxu0 0.0
    %1328 = vmatpush1.msra.mxu0 0.0
    %1329 = vmatprep.subr.mxu0 0.0
    %1330 = vmatpush1.msra.mxu0 0.0
    %1331 = vmatprep.subr.mxu0 0.0
    %1332 = vmatpush1.msra.mxu0 %v65
    %1333 = vmatprep.subr.mxu0 0.0
    %1334 = vmatpush1.msra.mxu0 %v64
    %1335 = vmatprep.subr.mxu0 0.0
    %1336 = vmatpush1.msra.mxu0 %v63
    %1337 = vmatprep.subr.mxu0 0.0
    %1338 = vmatpush1.msra.mxu0 %v62
    %1339 = vmatprep.subr.mxu0 0.0
    %1340 = vmatpush2.msra.mxu0 0.0
    %1341 = vmatprep.subr.mxu0 0.0
    %1342 = vmatpush2.msra.mxu0 0.0
    %1343 = vmatprep.subr.mxu0 0.0
    %1344 = vmatpush2.msra.mxu0 0.0
    %1345 = vmatprep.subr.mxu0 0.0
    %1346 = vmatpush2.msra.mxu0 0.0
    %1347 = vmatprep.subr.mxu0 0.0
    %1348 = vmatpush2.msra.mxu0 0.0
    %1349 = vmatprep.subr.mxu0 0.0
    %1350 = vmatpush2.msra.mxu0 0.0
    %1351 = vmatprep.subr.mxu0 0.0
    %1352 = vmatpush2.msra.mxu0 0.0
    %1353 = vmatprep.subr.mxu0 0.0
    %1354 = vmatpush2.msra.mxu0 0.0
    %1355 = vmatprep.subr.mxu0 0.0
    %1356 = vmatpush2.msra.mxu0 0.0
    %1357 = vmatprep.subr.mxu0 0.0
    %1358 = vmatpush2.msra.mxu0 0.0
    %1359 = vmatprep.subr.mxu0 0.0
    %1360 = vmatpush2.msra.mxu0 0.0
    %1361 = vmatprep.subr.mxu0 0.0
    %1362 = vmatpush2.msra.mxu0 0.0
    %1363 = vmatprep.subr.mxu0 0.0
    %1364 = vmatpush2.msra.mxu0 0.0
    %1365 = vmatprep.subr.mxu0 0.0
    %1366 = vmatpush2.msra.mxu0 0.0
    %1367 = vmatprep.subr.mxu0 0.0
    %1368 = vmatpush2.msra.mxu0 0.0
    %1369 = vmatprep.subr.mxu0 0.0
    %1370 = vmatpush2.msra.mxu0 0.0
    %1371 = vmatprep.mubr.f32.mxu0 0.0
    %1372 = vmatmul.mubr.f32.gmra.mxu0 %v1305
    %v1373 = vpop.f32.mrf.mxu0
    %v1374 = vadd.f32 0.0, %v1373
    %v1375 = vpop.f32.mrf.mxu0
    %1376 = vdwg.mxu0
    %v1378 = vrot.slane %v1374, 1
    %v1379 = vrot.slane %v1374, 2
    %v1382 = vadd.f32 %v68, %v1378
    %v1383 = vadd.f32 %v69, %v1379
    %v1384 = vxor.u32 %v1382, 2147483648
    %v1385 = vxor.u32 %v1383, 2147483648
    %v1386 = vmul.f32 %v1384, 1.442695
    %v1387 = vpow.pop %v1386
    %v1388 = vmul.f32 %v1385, 1.442695
    %v1389 = vpow.pop %v1388
    %v1390 = vadd.f32 %v1387, 1.0
    %v1391 = vadd.f32 %v1389, 1.0
    %v1392 = vrcp.pop %v1390
    %v1393 = vmul.f32 1.0, %v1392
    %v1394 = vrcp.pop %v1391
    %v1395 = vmul.f32 1.0, %v1394
    %v1396 = vtanh.pop %v1382
    %v1397 = vtanh.pop %v1383
    %v1400 = vrot.slane %v1250, 7
    %v1401 = vrot.slane %v1251, 7
    %v1404 = vmul.f32 %v1393, %v1400
    %v1405 = vmul.f32 %v1395, %v1401
    %1408 = vrot.lane.b32.xlu0 %v1396, 64
    %v1409 = vpop.permute.xlu0 %1408
    %1410 = vrot.lane.b32.xlu0 %v1397, 64
    %v1411 = vpop.permute.xlu0 %1410
    %v1414 = vmul.f32 %v1393, %v1409
    %v1415 = vmul.f32 %v1395, %v1411
    %1418 = vrot.lane.b32.xlu0 %v1414, 32
    %v1419 = vpop.permute.xlu0 %1418
    %1420 = vrot.lane.b32.xlu0 %v1415, 32
    %v1421 = vpop.permute.xlu0 %1420
    %v1424 = vadd.f32 %v1404, %v1419
    %v1425 = vadd.f32 %v1405, %v1421
    %v1426 = vround.ne.pseudo %v1303
    %v1427 = vtanh.pop %v1424
    %v1428 = vtanh.pop %v1425
    %1431 = vrot.lane.b32.xlu0 %v1427, 64
    %v1432 = vpop.permute.xlu0 %1431
    %1433 = vrot.lane.b32.xlu0 %v1428, 64
    %v1434 = vpop.permute.xlu0 %1433
    %v1437 = vmul.f32 %v1393, %v1432
    %v1438 = vmul.f32 %v1395, %v1434
    %1440 = vset.pattern.permute.xlu0 0
    %1441 = vperm.xlu0 %1440, %v1426
    %v1442 = vpop.permute.xlu0 %1441
    %v1446 = vrot.slane %v1437, 7
    %v1447 = vrot.slane %v1438, 6
    %v1448 = vsel %vm218, %v1447, %v1446
    %1449 = vrot.lane.b32.xlu0 %v1448, 32
    %v1450 = vpop.permute.xlu0 %1449
    %v1452 = vmul.f32 %v1442, %v1450
    %v1453 = vsub.f32 1.0, %v1426
    %1455 = vset.pattern.permute.xlu0 0
    %1456 = vperm.xlu0 %1455, %v1453
    %v1457 = vpop.permute.xlu0 %1456
    %v1459 = vmul.f32 %v1457, %v1286
    %v1460 = vadd.f32 %v1452, %v1459
    %v1461 = vmul.f32 %v1460, %v236
    %v1462 = vsel %vm239, %v1461, 0.0
    %1463 = vadd.xlane.f32.xlu0 %v1462
    %v1464 = vpop.xlane.xlu0 %1463
    %v1465 = vadd.f32 %v1464, %v247
    %v1466 = vxor.u32 %v1465, 2147483648
    %v1467 = vmul.f32 %v1466, 1.442695
    %v1468 = vpow.pop %v1467
    %v1469 = vadd.f32 %v1468, 1.0
    %v1470 = vrcp.pop %v1469
    %v1471 = vmul.f32 1.0, %v1470
    %v1472 = vmul.f32 %v1426, %v1471
    %v1473 = vsub.f32 1.0, %v1303
    %v1474 = vmin.f32 %v1471, %v1473
    %v1475 = vadd.f32 %v1303, %v1474
    %v1476 = vmul.f32 %v1453, %v1475
    %v1477 = vadd.f32 %v1472, %v1476
    %v1479 = vunpack.c.l.s4 1966171168
    %v1480 = vunpack.c.0.s8 %v1479
    %v1481 = vlaneseq
    %v1482 = vshrl.u32 %v1481, 7
    %v1483 = vsub.s32 %v1480, %v1482
    %v1484 = vrot.slane %v231, %v1483
    %v1485 = vcombine.high %v1484, %v1484
    %v1487 = vunpack.c.l.s4 1966171168
    %v1488 = vunpack.c.0.s8 %v1487
    %v1489 = vlaneseq
    %v1490 = vshrl.u32 %v1489, 7
    %v1491 = vsub.s32 %v1488, %v1490
    %v1492 = vrot.slane %v1484, %v1491
    %v1494 = vunpack.c.l.s4 1966171168
    %v1495 = vunpack.c.0.s8 %v1494
    %v1496 = vlaneseq
    %v1497 = vshrl.u32 %v1496, 7
    %v1498 = vsub.s32 %v1495, %v1497
    %v1499 = vrot.slane %v1485, %v1498
    %v1503 = vunpack.c.l.s4 1966171168
    %v1504 = vunpack.c.0.s8 %v1503
    %v1505 = vlaneseq
    %v1506 = vshrl.u32 %v1505, 7
    %v1507 = vsub.s32 %v1504, %v1506
    %v1508 = vrot.slane %v416, %v1507
    %v1509 = vcombine.high %v1508, %v1508
    %v1511 = vunpack.c.l.s4 1966171168
    %v1512 = vunpack.c.0.s8 %v1511
    %v1513 = vlaneseq
    %v1514 = vshrl.u32 %v1513, 7
    %v1515 = vsub.s32 %v1512, %v1514
    %v1516 = vrot.slane %v1508, %v1515
    %v1518 = vunpack.c.l.s4 1966171168
    %v1519 = vunpack.c.0.s8 %v1518
    %v1520 = vlaneseq
    %v1521 = vshrl.u32 %v1520, 7
    %v1522 = vsub.s32 %v1519, %v1521
    %v1523 = vrot.slane %v1509, %v1522
    %v1525 = vunpack.c.l.s4 1966171168
    %v1526 = vunpack.c.0.s8 %v1525
    %v1527 = vlaneseq
    %v1528 = vshrl.u32 %v1527, 7
    %v1529 = vsub.s32 %v1526, %v1528
    %v1530 = vrot.slane %v590, %v1529
    %v1531 = vcombine.high %v1530, %v1530
    %v1533 = vunpack.c.l.s4 1966171168
    %v1534 = vunpack.c.0.s8 %v1533
    %v1535 = vlaneseq
    %v1536 = vshrl.u32 %v1535, 7
    %v1537 = vsub.s32 %v1534, %v1536
    %v1538 = vrot.slane %v1530, %v1537
    %v1540 = vunpack.c.l.s4 1966171168
    %v1541 = vunpack.c.0.s8 %v1540
    %v1542 = vlaneseq
    %v1543 = vshrl.u32 %v1542, 7
    %v1544 = vsub.s32 %v1541, %v1543
    %v1545 = vrot.slane %v1531, %v1544
    %v1547 = vunpack.c.l.s4 1966171168
    %v1548 = vunpack.c.0.s8 %v1547
    %v1549 = vlaneseq
    %v1550 = vshrl.u32 %v1549, 7
    %v1551 = vsub.s32 %v1548, %v1550
    %v1552 = vrot.slane %v764, %v1551
    %v1553 = vcombine.high %v1552, %v1552
    %v1555 = vunpack.c.l.s4 1966171168
    %v1556 = vunpack.c.0.s8 %v1555
    %v1557 = vlaneseq
    %v1558 = vshrl.u32 %v1557, 7
    %v1559 = vsub.s32 %v1556, %v1558
    %v1560 = vrot.slane %v1552, %v1559
    %v1562 = vunpack.c.l.s4 1966171168
    %v1563 = vunpack.c.0.s8 %v1562
    %v1564 = vlaneseq
    %v1565 = vshrl.u32 %v1564, 7
    %v1566 = vsub.s32 %v1563, %v1565
    %v1567 = vrot.slane %v1553, %v1566
    %v1569 = vunpack.c.l.s4 1966171168
    %v1570 = vunpack.c.0.s8 %v1569
    %v1571 = vlaneseq
    %v1572 = vshrl.u32 %v1571, 7
    %v1573 = vsub.s32 %v1570, %v1572
    %v1574 = vrot.slane %v938, %v1573
    %v1575 = vcombine.high %v1574, %v1574
    %v1577 = vunpack.c.l.s4 1966171168
    %v1578 = vunpack.c.0.s8 %v1577
    %v1579 = vlaneseq
    %v1580 = vshrl.u32 %v1579, 7
    %v1581 = vsub.s32 %v1578, %v1580
    %v1582 = vrot.slane %v1574, %v1581
    %v1584 = vunpack.c.l.s4 1966171168
    %v1585 = vunpack.c.0.s8 %v1584
    %v1586 = vlaneseq
    %v1587 = vshrl.u32 %v1586, 7
    %v1588 = vsub.s32 %v1585, %v1587
    %v1589 = vrot.slane %v1575, %v1588
    %v1591 = vunpack.c.l.s4 1966171168
    %v1592 = vunpack.c.0.s8 %v1591
    %v1593 = vlaneseq
    %v1594 = vshrl.u32 %v1593, 7
    %v1595 = vsub.s32 %v1592, %v1594
    %v1596 = vrot.slane %v1112, %v1595
    %v1597 = vcombine.high %v1596, %v1596
    %v1599 = vunpack.c.l.s4 1966171168
    %v1600 = vunpack.c.0.s8 %v1599
    %v1601 = vlaneseq
    %v1602 = vshrl.u32 %v1601, 7
    %v1603 = vsub.s32 %v1600, %v1602
    %v1604 = vrot.slane %v1596, %v1603
    %v1606 = vunpack.c.l.s4 1966171168
    %v1607 = vunpack.c.0.s8 %v1606
    %v1608 = vlaneseq
    %v1609 = vshrl.u32 %v1608, 7
    %v1610 = vsub.s32 %v1607, %v1609
    %v1611 = vrot.slane %v1597, %v1610
    %v1613 = vunpack.c.l.s4 1966171168
    %v1614 = vunpack.c.0.s8 %v1613
    %v1615 = vlaneseq
    %v1616 = vshrl.u32 %v1615, 7
    %v1617 = vsub.s32 %v1614, %v1616
    %v1618 = vrot.slane %v1286, %v1617
    %v1619 = vcombine.high %v1618, %v1618
    %v1621 = vunpack.c.l.s4 1966171168
    %v1622 = vunpack.c.0.s8 %v1621
    %v1623 = vlaneseq
    %v1624 = vshrl.u32 %v1623, 7
    %v1625 = vsub.s32 %v1622, %v1624
    %v1626 = vrot.slane %v1618, %v1625
    %v1628 = vunpack.c.l.s4 1966171168
    %v1629 = vunpack.c.0.s8 %v1628
    %v1630 = vlaneseq
    %v1631 = vshrl.u32 %v1630, 7
    %v1632 = vsub.s32 %v1629, %v1631
    %v1633 = vrot.slane %v1619, %v1632
    %v1636 = vunpack.c.l.s4 1966171168
    %v1637 = vunpack.c.0.s8 %v1636
    %v1638 = vlaneseq
    %v1639 = vshrl.u32 %v1638, 7
    %v1640 = vsub.s32 %v1637, %v1639
    %v1641 = vrot.slane %v1460, %v1640
    %v1642 = vcombine.high %v1641, %v1641
    %v1644 = vunpack.c.l.s4 1966171168
    %v1645 = vunpack.c.0.s8 %v1644
    %v1646 = vlaneseq
    %v1647 = vshrl.u32 %v1646, 7
    %v1648 = vsub.s32 %v1645, %v1647
    %v1649 = vrot.slane %v1641, %v1648
    %v1651 = vunpack.c.l.s4 1966171168
    %v1652 = vunpack.c.0.s8 %v1651
    %v1653 = vlaneseq
    %v1654 = vshrl.u32 %v1653, 7
    %v1655 = vsub.s32 %v1652, %v1654
    %v1656 = vrot.slane %v1642, %v1655
    %v1657 = vlaneseq
    %v1658 = vshrl.u32 %v1657, 7
    %v1659 = vsub.s32 0, %v1658
    %v1660 = vrot.slane %v1516, %v1659
    %v1661 = vlaneseq
    %v1662 = vshrl.u32 %v1661, 7
    %v1663 = vsub.s32 0, %v1662
    %v1664 = vrot.slane %v1523, %v1663
    %v1667 = vlaneseq
    %v1668 = vshrl.u32 %v1667, 7
    %v1669 = vsub.s32 0, %v1668
    %v1670 = vrot.slane %v1538, %v1669
    %v1671 = vlaneseq
    %v1672 = vshrl.u32 %v1671, 7
    %v1673 = vsub.s32 0, %v1672
    %v1674 = vrot.slane %v1545, %v1673
    %v1677 = vlaneseq
    %v1678 = vshrl.u32 %v1677, 7
    %v1679 = vsub.s32 0, %v1678
    %v1680 = vrot.slane %v1560, %v1679
    %v1681 = vlaneseq
    %v1682 = vshrl.u32 %v1681, 7
    %v1683 = vsub.s32 0, %v1682
    %v1684 = vrot.slane %v1567, %v1683
    %v1687 = vlaneseq
    %v1688 = vshrl.u32 %v1687, 7
    %v1689 = vsub.s32 0, %v1688
    %v1690 = vrot.slane %v1582, %v1689
    %v1691 = vlaneseq
    %v1692 = vshrl.u32 %v1691, 7
    %v1693 = vsub.s32 0, %v1692
    %v1694 = vrot.slane %v1589, %v1693
    %v1697 = vlaneseq
    %v1698 = vshrl.u32 %v1697, 7
    %v1699 = vsub.s32 0, %v1698
    %v1700 = vrot.slane %v1604, %v1699
    %v1701 = vlaneseq
    %v1702 = vshrl.u32 %v1701, 7
    %v1703 = vsub.s32 0, %v1702
    %v1704 = vrot.slane %v1611, %v1703
    %v1707 = vlaneseq
    %v1708 = vshrl.u32 %v1707, 7
    %v1709 = vsub.s32 0, %v1708
    %v1710 = vrot.slane %v1626, %v1709
    %v1711 = vlaneseq
    %v1712 = vshrl.u32 %v1711, 7
    %v1713 = vsub.s32 0, %v1712
    %v1714 = vrot.slane %v1633, %v1713
    %v1717 = vlaneseq
    %v1718 = vshrl.u32 %v1717, 7
    %v1719 = vsub.s32 0, %v1718
    %v1720 = vrot.slane %v1649, %v1719
    %v1721 = vlaneseq
    %v1722 = vshrl.u32 %v1721, 7
    %v1723 = vsub.s32 0, %v1722
    %v1724 = vrot.slane %v1656, %v1723
    %vm1727 = vcmask 1040384
    %v1728 = vsel %vm1727, %v1492, %v1660
    %v1729 = vsel %vm1727, %v1499, %v1664
    %vm1730 = vcmask 1041408
    %v1731 = vsel %vm1730, %v1728, %v1670
    %v1732 = vsel %vm1730, %v1729, %v1674
    %vm1733 = vcmask 1042432
    %v1734 = vsel %vm1733, %v1731, %v1680
    %v1735 = vsel %vm1733, %v1732, %v1684
    %vm1736 = vcmask 1043456
    %v1737 = vsel %vm1736, %v1734, %v1690
    %v1738 = vsel %vm1736, %v1735, %v1694
    %vm1739 = vcmask 1044480
    %v1740 = vsel %vm1739, %v1737, %v1700
    %v1741 = vsel %vm1739, %v1738, %v1704
    %vm1742 = vcmask 1045504
    %v1743 = vsel %vm1742, %v1740, %v1710
    %v1744 = vsel %vm1742, %v1741, %v1714
    %vm1745 = vcmask 1046528
    %v1746 = vsel %vm1745, %v1743, %v1720
    %v1747 = vsel %vm1745, %v1744, %v1724
    %1748 = vst.msk [vmem:[#allocation11] sm:$0xff] %vm73, %v1746
    %1749 = vst.msk [vmem:[#allocation11 + $0x8] sm:$0xff] %vm73, %v1747
    %1750 = vst.msk [vmem:[#allocation2] sm:$0x3] %vm239, %v1460
    %v1753 = vrot.slane %v1425, 7
    %1754 = vrot.lane.b32.xlu0 %v1424, 96
    %v1755 = vpop.permute.xlu0 %1754
    %1756 = vrot.lane.b32.xlu0 %v1753, 96
    %v1757 = vpop.permute.xlu0 %1756
    %vm1760 = vcmask 261127
    %1761 = vst.msk [vmem:[#allocation3 - $0x7] sm:$0x80] %vm1760, %v1755
    %vm1762 = vcmask 253952
    %1763 = vst.msk [vmem:[#allocation3 + $0x1] sm:$0x1] %vm1762, %v1757
    %vm1764 = vcmask 1024
    %1765 = vst.msk [vmem:[#allocation4] sm:$0x3] %vm1764, %v1477
    // Predicated region
    $region30: #{tpu_custom_call.1} parent=1 // pred_check
      %p1766 = pneg %p53
    $region31: #{tpu_custom_call.1} parent=1 // pred_check_branch
      %1768 = sbr.rel (%p1766) target = $region33
    $region32: #{tpu_custom_call.1} parent=1 // pred_region
      %1769 = vst.msk [vmem:[#allocation12] sm:$0x3] %vm239, %v1460
      %1770 = vst.msk [vmem:[#allocation14 - $0x7] sm:$0x80] %vm1760, %v1755
      %1771 = vst.msk [vmem:[#allocation14 + $0x1] sm:$0x1] %vm1762, %v1757
      %1772 = vst.msk [vmem:[%s7] sm:$0x3] %vm1764, %v1477
    $region33: #{tpu_custom_call.1} parent=1 // pred_fallthru
      _
    // Predicated region
    $region34: #{tpu_custom_call.1} parent=1 // pred_check
      _
    $region35: #{tpu_custom_call.1} parent=1 // pred_check_branch
      %1774 = sbr.rel (0) target = $region37
    $region36: #{tpu_custom_call.1} parent=1 // pred_region
      %s1776 = ssub.s32 256, 256
      %1777 = vsyncadd [#allocation8], %s1776
      %s1778 = sshll.u32 [#allocation11], 4
      %s1779 = int_to_ptr.vmem [resolvable:$true] %s1778
      %1784 = dma.vmem_to_hbm [thread:$0]  %s1779, 256, %s4, [#allocation8], 128, 128, 8
    $region37: #{tpu_custom_call.1} parent=1 // pred_fallthru
      _
    // Predicated region
    $region38: #{tpu_custom_call.1} parent=1 // pred_check
      _
    $region39: #{tpu_custom_call.1} parent=1 // pred_check_branch
      %1786 = sbr.rel (0) target = $region41
    $region40: #{tpu_custom_call.1} parent=1 // pred_region
      %s1788 = ssub.s32 32, 32
      %1789 = vsyncadd [#allocation13], %s1788
      %s1791 = sshll.u32 [#allocation12], 4
      %s1792 = int_to_ptr.vmem [resolvable:$true] %s1791
      %1794 = dma.vmem_to_hbm [thread:$0]  %s1792, 32, %s5, [#allocation13]
    $region41: #{tpu_custom_call.1} parent=1 // pred_fallthru
      _
    // Predicated region
    $region42: #{tpu_custom_call.1} parent=1 // pred_check
      _
    $region43: #{tpu_custom_call.1} parent=1 // pred_check_branch
      %1796 = sbr.rel (0) target = $region45
    $region44: #{tpu_custom_call.1} parent=1 // pred_region
      %s1798 = ssub.s32 32, 32
      %1799 = vsyncadd [#allocation13], %s1798
      %s1801 = sshll.u32 [#allocation14], 4
      %s1802 = int_to_ptr.vmem [resolvable:$true] %s1801
      %1804 = dma.vmem_to_hbm [thread:$0]  %s1802, 32, %s6, [#allocation13]
    $region45: #{tpu_custom_call.1} parent=1 // pred_fallthru
      _
    // Predicated region
    $region46: #{tpu_custom_call.1} parent=1 // pred_check
      _
    $region47: #{tpu_custom_call.1} parent=1 // pred_check_branch
      %1806 = sbr.rel (0) target = $region49
    $region48: #{tpu_custom_call.1} parent=1 // pred_region
      _
    $region49: #{tpu_custom_call.1} parent=1 // pred_fallthru
      _
    // Predicated region
    $region50: #{tpu_custom_call.1} parent=1 // pred_check
      _
    $region51: #{tpu_custom_call.1} parent=1 // pred_check_branch
      %1808 = sbr.rel (0) target = $region53
    $region52: #{tpu_custom_call.1} parent=1 // pred_region
      %1809 = dma.done [#allocation8], 256
    $region53: #{tpu_custom_call.1} parent=1 // pred_fallthru
      _
    // Predicated region
    $region54: #{tpu_custom_call.1} parent=1 // pred_check
      _
    $region55: #{tpu_custom_call.1} parent=1 // pred_check_branch
      %1811 = sbr.rel (0) target = $region57
    $region56: #{tpu_custom_call.1} parent=1 // pred_region
      %1812 = dma.done [#allocation13], 32
    $region57: #{tpu_custom_call.1} parent=1 // pred_fallthru
      _
    // Predicated region
    $region58: #{tpu_custom_call.1} parent=1 // pred_check
      _
    $region59: #{tpu_custom_call.1} parent=1 // pred_check_branch
      %1814 = sbr.rel (0) target = $region61
    $region60: #{tpu_custom_call.1} parent=1 // pred_region
      %1815 = dma.done [#allocation13], 32
    $region61: #{tpu_custom_call.1} parent=1 // pred_fallthru
      _
    // Predicated region
    $region62: #{tpu_custom_call.1} parent=1 // pred_check
      _
    $region63: #{tpu_custom_call.1} parent=1 // pred_check_branch
      %1817 = sbr.rel (0) target = $region65
    $region64: #{tpu_custom_call.1} parent=1 // pred_region
      _
    $region65: #{tpu_custom_call.1} parent=1 // pred_fallthru
      _
    %1818 = vsyncpa [#allocation7], 1
    %1819 = vsyncpa [#allocation10], 1
    %1820 = vsyncpa [#allocation8], 1
    %1821 = vsyncpa [#allocation13], 1

</llo_original>
